<compile_context>
chip_gen: v7x
topology: tpu7x:2x2x1
jax: 0.10.0
libtpu: 0.0.40
codegen_flags: <defaults>
</compile_context>

<pallas_src>
import math
import functools

import jax
import jax.numpy as jnp
from jax.experimental import pallas as pl
from jax.experimental.pallas import tpu as pltpu


def _sdpa_kernel(q_ref, k_ref, v_ref, mask_ref, ctx_ref, attn_ref, *, scale):
    # Each block holds G (batch*head) slices and TQ query rows:
    #   q: [G, TQ, Dk]  k: [G, Lk, Dk]  v: [G, Lk, Dv]  mask: [G, TQ, Lk]
    q = q_ref[...] * jnp.asarray(scale, q_ref.dtype)   # fold 1/sqrt(d_k) into Q
    k = k_ref[...]
    v = v_ref[...]
    m = mask_ref[...]
    masked = m if m.dtype == jnp.bool_ else (m != 0)

    # scores = (Q*scale) @ K^T — contracting-last-dim einsum, no explicit K
    # transpose; native-dtype MXU operands, f32 accumulation.
    scores = jnp.einsum("gqd,gkd->gqk", q, k,
                        preferred_element_type=jnp.float32)

    # masked_fill_(attn_mask, -1e9)
    scores = jnp.where(masked, jnp.float32(-1.0e9), scores)

    # Numerically-stable softmax over the last dim.
    s_max = jnp.max(scores, axis=-1, keepdims=True)
    e = jnp.exp(scores - s_max)
    denom = jnp.sum(e, axis=-1, keepdims=True)              # [G, TQ, 1]
    r = pl.reciprocal(denom, approx=True)                   # EUP slot
    r = r * (jnp.float32(2.0) - denom * r)                  # 1 Newton step -> ~exact
    attn = e * r                                            # [G, TQ, Lk] f32

    # Cast once; reuse for both the writeback and the attn@V matmul.
    attn_lo = attn.astype(v.dtype)
    attn_ref[...] = attn_lo.astype(attn_ref.dtype)          # no-op when dtypes match

    ctx = jnp.einsum("gqk,gkd->gqd", attn_lo, v,
                     preferred_element_type=jnp.float32)
    ctx_ref[...] = ctx.astype(ctx_ref.dtype)


def _vmem_capacity_bytes():
    try:
        return int(pltpu.get_tpu_info().vmem_capacity_bytes)
    except Exception:
        return 64 * 1024 * 1024   # conservative default (v7x-sized VMEM)


def _pick_q_tile(Lq):
    """TQ ~ 128-256 for long sequences, full Lq otherwise (keeps (8,128) rule)."""
    if Lq <= 256:
        return Lq
    for t in (256, 128, 64, 32, 16, 8):
        if Lq % t == 0:
            return t
    return Lq


def _pick_group_size(BH, per_group_bytes, budget_bytes, q_tiles, min_total_steps):
    """Largest divisor G of BH whose (double-buffered) working set fits the
    budget, keeping enough total grid steps for pipelining / megacore."""
    min_total_steps = min(min_total_steps, BH * q_tiles)
    best = 1
    for g in range(1, BH + 1):
        if BH % g:
            continue
        if g * per_group_bytes > budget_bytes:
            continue
        if (BH // g) * q_tiles < min_total_steps:
            continue
        best = g
    return best


def scaled_dot_product_attention(Q, K, V, attn_mask, d_k, attn_dtype=None):
    """Q: [B,H,Lq,Dk]  K: [B,H,Lk,Dk]  V: [B,H,Lk,Dv]  attn_mask: [B,H,Lq,Lk] bool.

    attn_dtype: optional override for the returned attention matrix dtype
    (e.g. jnp.bfloat16 to halve the dominant HBM writeback on v5e); defaults
    to Q.dtype for PyTorch parity.
    """
    B, H, Lq, Dk = Q.shape
    Lk = K.shape[2]
    Dv = V.shape[3]
    BH = B * H
    attn_dtype = Q.dtype if attn_dtype is None else attn_dtype

    q = Q.reshape(BH, Lq, Dk)
    k = K.reshape(BH, Lk, Dk)
    v = V.reshape(BH, Lk, Dv)
    # No dtype recast here: bool already occupies 1 byte/elem, so passing it
    # through avoids an extra full read+write HBM pass before the kernel.
    mask = attn_mask.reshape(BH, Lq, Lk)

    TQ = _pick_q_tile(Lq)
    n_q_tiles = Lq // TQ

    in_isz = jnp.dtype(Q.dtype).itemsize
    attn_isz = jnp.dtype(attn_dtype).itemsize
    mask_isz = jnp.dtype(mask.dtype).itemsize

    # Generation-aware sizing: 128 MiB VMEM (v5e/v6e, 1 TC) vs 64 MiB (v7x, 2 TC).
    vmem_cap = _vmem_capacity_bytes()
    if vmem_cap >= 96 * 1024 * 1024:
        budget_bytes = 28 * 1024 * 1024
        vmem_limit = 96 * 1024 * 1024
        min_total_steps = 1            # single TensorCore: no sharding constraint
    else:
        budget_bytes = 14 * 1024 * 1024
        vmem_limit = 48 * 1024 * 1024
        min_total_steps = 4            # >= 2 pipelined steps per v7x core

    per_group_bytes = (
        2 * (TQ * Dk + Lk * Dk + Lk * Dv) * in_isz   # double-buffered Q/K/V tiles
        + 2 * TQ * Lk * mask_isz                      # mask tile
        + 2 * TQ * Dv * in_isz                        # ctx output tile
        + 2 * TQ * Lk * attn_isz                      # attn output tile
        + 2 * TQ * Lk * 4                             # f32 scores / attn intermediates
    )
    G = _pick_group_size(BH, per_group_bytes, budget_bytes, n_q_tiles,
                         min_total_steps)
    n_blocks = BH // G

    scale = 1.0 / math.sqrt(d_k)
    kernel = functools.partial(_sdpa_kernel, scale=scale)

    cost = pl.CostEstimate(
        flops=2 * BH * Lq * Lk * (Dk + Dv),
        transcendentals=BH * Lq * Lk,
        bytes_accessed=(
            (BH * Lq * Dk + BH * Lk * Dk + BH * Lk * Dv + BH * Lq * Dv) * in_isz
            + BH * Lq * Lk * (mask_isz + attn_isz)),
    )

    def _run(mask_arr):
        return pl.pallas_call(
            kernel,
            out_shape=(
                jax.ShapeDtypeStruct((BH, Lq, Dv), Q.dtype),
                jax.ShapeDtypeStruct((BH, Lq, Lk), attn_dtype),
            ),
            grid_spec=pltpu.PrefetchScalarGridSpec(
                num_scalar_prefetch=0,
                grid=(n_blocks, n_q_tiles),
                in_specs=[
                    pl.BlockSpec((G, TQ, Dk), lambda i, j: (i, j, 0)),
                    pl.BlockSpec((G, Lk, Dk), lambda i, j: (i, 0, 0)),  # resident over q tiles
                    pl.BlockSpec((G, Lk, Dv), lambda i, j: (i, 0, 0)),  # resident over q tiles
                    pl.BlockSpec((G, TQ, Lk), lambda i, j: (i, j, 0)),
                ],
                out_specs=[
                    pl.BlockSpec((G, TQ, Dv), lambda i, j: (i, j, 0)),
                    pl.BlockSpec((G, TQ, Lk), lambda i, j: (i, j, 0)),
                ],
            ),
            compiler_params=pltpu.CompilerParams(
                dimension_semantics=("parallel", "parallel"),
                vmem_limit_bytes=vmem_limit,
            ),
            cost_estimate=cost,
        )(q, k, v, mask_arr)

    if mask.dtype == jnp.bool_:
        try:
            ctx, attn = _run(mask)
        except Exception:
            # Fallback only if this Mosaic version rejects bool kernel inputs.
            ctx, attn = _run(mask.astype(jnp.int8))
    else:
        ctx, attn = _run(mask)

    context = ctx.reshape(B, H, Lq, Dv)
    attn = attn.reshape(B, H, Lq, Lk)
    return context, attn


def _reference(Q, K, V, attn_mask, d_k):
    scores = jnp.einsum("bhqd,bhkd->bhqk", Q, K) / jnp.sqrt(jnp.float32(d_k))
    scores = jnp.where(attn_mask, -1.0e9, scores)
    attn = jax.nn.softmax(scores, axis=-1)
    context = jnp.einsum("bhqk,bhkd->bhqd", attn, V)
    return context, attn


if __name__ == "__main__":
    B, H, Lq, Lk, d_k, d_v = 2, 4, 8, 8, 32, 32

    key = jax.random.PRNGKey(0)
    kq, kk, kv, km = jax.random.split(key, 4)
    Q = jax.random.normal(kq, (B, H, Lq, d_k), dtype=jnp.float32)
    K = jax.random.normal(kk, (B, H, Lk, d_k), dtype=jnp.float32)
    V = jax.random.normal(kv, (B, H, Lk, d_v), dtype=jnp.float32)
    # Boolean mask (True = position is masked out); ensure no fully-masked row.
    attn_mask = jax.random.bernoulli(km, 0.25, (B, H, Lq, Lk))
    attn_mask = attn_mask.at[..., 0].set(False)

    context, attn = scaled_dot_product_attention(Q, K, V, attn_mask, d_k)
    jax.block_until_ready((context, attn))

    ctx_ref, attn_ref = _reference(Q, K, V, attn_mask, d_k)
    assert jnp.allclose(context, ctx_ref, atol=2e-3, rtol=2e-3)
    assert jnp.allclose(attn, attn_ref, atol=2e-3, rtol=2e-3)

    print("KERNEL_OK")
</pallas_src>

<mosaic_0001>
module attributes {stable_mosaic.version = 11 : i64} {
  func.func @_sdpa_kernel(%arg0: i32, %arg1: i32, %arg2: memref<2x8x32xf32, #tpu.memory_space<vmem>>, %arg3: memref<2x8x32xf32, #tpu.memory_space<vmem>>, %arg4: memref<2x8x32xf32, #tpu.memory_space<vmem>>, %arg5: memref<2x8x8xi32, #tpu.memory_space<vmem>>, %arg6: memref<2x8x32xf32, #tpu.memory_space<vmem>>, %arg7: memref<2x8x8xf32, #tpu.memory_space<vmem>>) attributes {dimension_semantics = [#tpu.dimension_semantics<parallel>, #tpu.dimension_semantics<parallel>], iteration_bounds = array<i64: 4, 1>, scalar_prefetch = 0 : i64, scratch_operands = 0 : i64, tpu.core_type = #tpu.core_type<tc>, window_params = [{transform_indices = @transform_0, window_bounds = array<i64: 2, 8, 32>}, {transform_indices = @transform_1, window_bounds = array<i64: 2, 8, 32>}, {transform_indices = @transform_2, window_bounds = array<i64: 2, 8, 32>}, {transform_indices = @transform_3, window_bounds = array<i64: 2, 8, 8>}, {transform_indices = @transform_4, window_bounds = array<i64: 2, 8, 32>}, {transform_indices = @transform_5, window_bounds = array<i64: 2, 8, 8>}]} {
    %c0 = arith.constant 0 : index
    %c0_0 = arith.constant 0 : index
    %c0_1 = arith.constant 0 : index
    %0 = vector.load %arg2[%c0, %c0_0, %c0_1] : memref<2x8x32xf32, #tpu.memory_space<vmem>>, vector<2x8x32xf32>
    %cst = arith.constant 0.176776692 : f32
    %1 = vector.broadcast %cst : f32 to vector<2x8x32xf32>
    %2 = arith.mulf %0, %1 : vector<2x8x32xf32>
    %c0_2 = arith.constant 0 : index
    %c0_3 = arith.constant 0 : index
    %c0_4 = arith.constant 0 : index
    %3 = vector.load %arg3[%c0_2, %c0_3, %c0_4] : memref<2x8x32xf32, #tpu.memory_space<vmem>>, vector<2x8x32xf32>
    %c0_5 = arith.constant 0 : index
    %c0_6 = arith.constant 0 : index
    %c0_7 = arith.constant 0 : index
    %4 = vector.load %arg4[%c0_5, %c0_6, %c0_7] : memref<2x8x32xf32, #tpu.memory_space<vmem>>, vector<2x8x32xf32>
    %c0_8 = arith.constant 0 : index
    %c0_9 = arith.constant 0 : index
    %c0_10 = arith.constant 0 : index
    %5 = vector.load %arg5[%c0_8, %c0_9, %c0_10] : memref<2x8x8xi32, #tpu.memory_space<vmem>>, vector<2x8x8xi32>
    %cst_11 = arith.constant dense<0> : vector<2x8x8xi32>
    %6 = arith.cmpi ne, %5, %cst_11 : vector<2x8x8xi32>
    "tpu.trace_start"() <{level = 10 : i32, message = "gqd,gkd->gqk"}> : () -> ()
    %cst_12 = arith.constant dense<0.000000e+00> : vector<2x8x8xf32>
    %7 = tpu.matmul %2, %3, %cst_12 {dimension_numbers = #tpu.dot_dimension_numbers<[2], [2], [1], [1], [0, 0, 0, 1, 1, 1], [0], [0]>} : vector<2x8x32xf32>, vector<2x8x32xf32>, vector<2x8x8xf32> -> vector<2x8x8xf32>
    %cst_13 = arith.constant -1.000000e+09 : f32
    "tpu.trace_stop"() : () -> ()
    %8 = vector.broadcast %cst_13 : f32 to vector<2x8x8xf32>
    %9 = arith.select %6, %8, %7 : vector<2x8x8xi1>, vector<2x8x8xf32>
    %cst_14 = arith.constant dense<0xFF800000> : vector<2x8xf32>
    %10 = vector.multi_reduction <maximumf>, %9, %cst_14 [2] : vector<2x8x8xf32> to vector<2x8xf32>
    %11 = vector.shape_cast %10 : vector<2x8xf32> to vector<2x8x1xf32>
    %12 = vector.broadcast %11 : vector<2x8x1xf32> to vector<2x8x8xf32>
    %13 = arith.subf %9, %12 : vector<2x8x8xf32>
    %14 = math.exp %13 : vector<2x8x8xf32>
    %cst_15 = arith.constant dense<0.000000e+00> : vector<2x8xf32>
    %15 = vector.multi_reduction <add>, %14, %cst_15 [2] : vector<2x8x8xf32> to vector<2x8xf32>
    %16 = vector.shape_cast %15 : vector<2x8xf32> to vector<2x8x1xf32>
    %17 = tpu.reciprocal %16 {approx = true} : vector<2x8x1xf32> -> vector<2x8x1xf32>
    %18 = arith.mulf %16, %17 : vector<2x8x1xf32>
    %cst_16 = arith.constant 2.000000e+00 : f32
    %19 = vector.broadcast %cst_16 : f32 to vector<2x8x1xf32>
    %20 = arith.subf %19, %18 : vector<2x8x1xf32>
    %21 = arith.mulf %17, %20 : vector<2x8x1xf32>
    %22 = vector.broadcast %21 : vector<2x8x1xf32> to vector<2x8x8xf32>
    %23 = arith.mulf %14, %22 : vector<2x8x8xf32>
    %c0_17 = arith.constant 0 : index
    %c0_18 = arith.constant 0 : index
    %c0_19 = arith.constant 0 : index
    %24 = vector.load %arg7[%c0_17, %c0_18, %c0_19] : memref<2x8x8xf32, #tpu.memory_space<vmem>>, vector<2x8x8xf32>
    tpu.vector_store %arg7[%c0_17, %c0_18, %c0_19], %23 {strides = array<i32>} : memref<2x8x8xf32, #tpu.memory_space<vmem>>, vector<2x8x8xf32>,
    "tpu.trace_start"() <{level = 10 : i32, message = "gqk,gkd->gqd"}> : () -> ()
    %cst_20 = arith.constant dense<0.000000e+00> : vector<2x8x32xf32>
    %25 = tpu.matmul %23, %4, %cst_20 {dimension_numbers = #tpu.dot_dimension_numbers<[2], [1], [1], [2], [0, 0, 0, 1, 1, 2], [0], [0]>} : vector<2x8x8xf32>, vector<2x8x32xf32>, vector<2x8x32xf32> -> vector<2x8x32xf32>
    "tpu.trace_stop"() : () -> ()
    %c0_21 = arith.constant 0 : index
    %c0_22 = arith.constant 0 : index
    %c0_23 = arith.constant 0 : index
    %26 = vector.load %arg6[%c0_21, %c0_22, %c0_23] : memref<2x8x32xf32, #tpu.memory_space<vmem>>, vector<2x8x32xf32>
    tpu.vector_store %arg6[%c0_21, %c0_22, %c0_23], %25 {strides = array<i32>} : memref<2x8x32xf32, #tpu.memory_space<vmem>>, vector<2x8x32xf32>,
    return
  }
  func.func @transform_0(%arg0: i32, %arg1: i32) -> (i32, i32, i32) {
    %c0_i32 = arith.constant 0 : i32
    %c0_i32_0 = arith.constant 0 : i32
    return %arg0, %arg1, %c0_i32 : i32, i32, i32
  }
  func.func @transform_1(%arg0: i32, %arg1: i32) -> (i32, i32, i32) {
    %c0_i32 = arith.constant 0 : i32
    %c0_i32_0 = arith.constant 0 : i32
    %c0_i32_1 = arith.constant 0 : i32
    return %arg0, %c0_i32, %c0_i32_0 : i32, i32, i32
  }
  func.func @transform_2(%arg0: i32, %arg1: i32) -> (i32, i32, i32) {
    %c0_i32 = arith.constant 0 : i32
    %c0_i32_0 = arith.constant 0 : i32
    %c0_i32_1 = arith.constant 0 : i32
    return %arg0, %c0_i32, %c0_i32_0 : i32, i32, i32
  }
  func.func @transform_3(%arg0: i32, %arg1: i32) -> (i32, i32, i32) {
    %c0_i32 = arith.constant 0 : i32
    %c0_i32_0 = arith.constant 0 : i32
    return %arg0, %arg1, %c0_i32 : i32, i32, i32
  }
  func.func @transform_4(%arg0: i32, %arg1: i32) -> (i32, i32, i32) {
    %c0_i32 = arith.constant 0 : i32
    %c0_i32_0 = arith.constant 0 : i32
    return %arg0, %arg1, %c0_i32 : i32, i32, i32
  }
  func.func @transform_5(%arg0: i32, %arg1: i32) -> (i32, i32, i32) {
    %c0_i32 = arith.constant 0 : i32
    %c0_i32_0 = arith.constant 0 : i32
    return %arg0, %arg1, %c0_i32 : i32, i32, i32
  }
}

module attributes {stable_mosaic.version = 11 : i64} {
  func.func @_sdpa_kernel(%arg0: i32, %arg1: i32, %arg2: memref<2x8x32xf32, #tpu.memory_space<vmem>>, %arg3: memref<2x8x32xf32, #tpu.memory_space<vmem>>, %arg4: memref<2x8x32xf32, #tpu.memory_space<vmem>>, %arg5: memref<2x8x8xi8, #tpu.memory_space<vmem>>, %arg6: memref<2x8x32xf32, #tpu.memory_space<vmem>>, %arg7: memref<2x8x8xf32, #tpu.memory_space<vmem>>) attributes {dimension_semantics = [#tpu.dimension_semantics<parallel>, #tpu.dimension_semantics<parallel>], iteration_bounds = array<i64: 4, 1>, scalar_prefetch = 0 : i64, scratch_operands = 0 : i64, tpu.core_type = #tpu.core_type<tc>, window_params = [{transform_indices = @transform_0, window_bounds = array<i64: 2, 8, 32>}, {transform_indices = @transform_1, window_bounds = array<i64: 2, 8, 32>}, {transform_indices = @transform_2, window_bounds = array<i64: 2, 8, 32>}, {transform_indices = @transform_3, window_bounds = array<i64: 2, 8, 8>}, {transform_indices = @transform_4, window_bounds = array<i64: 2, 8, 32>}, {transform_indices = @transform_5, window_bounds = array<i64: 2, 8, 8>}]} {
    %c0 = arith.constant 0 : index
    %c0_0 = arith.constant 0 : index
    %c0_1 = arith.constant 0 : index
    %0 = vector.load %arg2[%c0, %c0_0, %c0_1] : memref<2x8x32xf32, #tpu.memory_space<vmem>>, vector<2x8x32xf32>
    %cst = arith.constant 0.176776692 : f32
    %1 = vector.broadcast %cst : f32 to vector<2x8x32xf32>
    %2 = arith.mulf %0, %1 : vector<2x8x32xf32>
    %c0_2 = arith.constant 0 : index
    %c0_3 = arith.constant 0 : index
    %c0_4 = arith.constant 0 : index
    %3 = vector.load %arg3[%c0_2, %c0_3, %c0_4] : memref<2x8x32xf32, #tpu.memory_space<vmem>>, vector<2x8x32xf32>
    %c0_5 = arith.constant 0 : index
    %c0_6 = arith.constant 0 : index
    %c0_7 = arith.constant 0 : index
    %4 = vector.load %arg4[%c0_5, %c0_6, %c0_7] : memref<2x8x32xf32, #tpu.memory_space<vmem>>, vector<2x8x32xf32>
    %c0_8 = arith.constant 0 : index
    %c0_9 = arith.constant 0 : index
    %c0_10 = arith.constant 0 : index
    %5 = vector.load %arg5[%c0_8, %c0_9, %c0_10] : memref<2x8x8xi8, #tpu.memory_space<vmem>>, vector<2x8x8xi8>
    %c0_i8 = arith.constant 0 : i8
    %6 = vector.broadcast %c0_i8 : i8 to vector<2x8x8xi8>
    %7 = arith.cmpi ne, %5, %6 : vector<2x8x8xi8>
    "tpu.trace_start"() <{level = 10 : i32, message = "gqd,gkd->gqk"}> : () -> ()
    %cst_11 = arith.constant dense<0.000000e+00> : vector<2x8x8xf32>
    %8 = tpu.matmul %2, %3, %cst_11 {dimension_numbers = #tpu.dot_dimension_numbers<[2], [2], [1], [1], [0, 0, 0, 1, 1, 1], [0], [0]>} : vector<2x8x32xf32>, vector<2x8x32xf32>, vector<2x8x8xf32> -> vector<2x8x8xf32>
    %cst_12 = arith.constant -1.000000e+09 : f32
    "tpu.trace_stop"() : () -> ()
    %9 = vector.broadcast %cst_12 : f32 to vector<2x8x8xf32>
    %10 = arith.select %7, %9, %8 : vector<2x8x8xi1>, vector<2x8x8xf32>
    %cst_13 = arith.constant dense<0xFF800000> : vector<2x8xf32>
    %11 = vector.multi_reduction <maximumf>, %10, %cst_13 [2] : vector<2x8x8xf32> to vector<2x8xf32>
    %12 = vector.shape_cast %11 : vector<2x8xf32> to vector<2x8x1xf32>
    %13 = vector.broadcast %12 : vector<2x8x1xf32> to vector<2x8x8xf32>
    %14 = arith.subf %10, %13 : vector<2x8x8xf32>
    %15 = math.exp %14 : vector<2x8x8xf32>
    %cst_14 = arith.constant dense<0.000000e+00> : vector<2x8xf32>
    %16 = vector.multi_reduction <add>, %15, %cst_14 [2] : vector<2x8x8xf32> to vector<2x8xf32>
    %17 = vector.shape_cast %16 : vector<2x8xf32> to vector<2x8x1xf32>
    %18 = tpu.reciprocal %17 {approx = true} : vector<2x8x1xf32> -> vector<2x8x1xf32>
    %19 = arith.mulf %17, %18 : vector<2x8x1xf32>
    %cst_15 = arith.constant 2.000000e+00 : f32
    %20 = vector.broadcast %cst_15 : f32 to vector<2x8x1xf32>
    %21 = arith.subf %20, %19 : vector<2x8x1xf32>
    %22 = arith.mulf %18, %21 : vector<2x8x1xf32>
    %23 = vector.broadcast %22 : vector<2x8x1xf32> to vector<2x8x8xf32>
    %24 = arith.mulf %15, %23 : vector<2x8x8xf32>
    %c0_16 = arith.constant 0 : index
    %c0_17 = arith.constant 0 : index
    %c0_18 = arith.constant 0 : index
    %25 = vector.load %arg7[%c0_16, %c0_17, %c0_18] : memref<2x8x8xf32, #tpu.memory_space<vmem>>, vector<2x8x8xf32>
    tpu.vector_store %arg7[%c0_16, %c0_17, %c0_18], %24 {strides = array<i32>} : memref<2x8x8xf32, #tpu.memory_space<vmem>>, vector<2x8x8xf32>,
    "tpu.trace_start"() <{level = 10 : i32, message = "gqk,gkd->gqd"}> : () -> ()
    %cst_19 = arith.constant dense<0.000000e+00> : vector<2x8x32xf32>
    %26 = tpu.matmul %24, %4, %cst_19 {dimension_numbers = #tpu.dot_dimension_numbers<[2], [1], [1], [2], [0, 0, 0, 1, 1, 2], [0], [0]>} : vector<2x8x8xf32>, vector<2x8x32xf32>, vector<2x8x32xf32> -> vector<2x8x32xf32>
    "tpu.trace_stop"() : () -> ()
    %c0_20 = arith.constant 0 : index
    %c0_21 = arith.constant 0 : index
    %c0_22 = arith.constant 0 : index
    %27 = vector.load %arg6[%c0_20, %c0_21, %c0_22] : memref<2x8x32xf32, #tpu.memory_space<vmem>>, vector<2x8x32xf32>
    tpu.vector_store %arg6[%c0_20, %c0_21, %c0_22], %26 {strides = array<i32>} : memref<2x8x32xf32, #tpu.memory_space<vmem>>, vector<2x8x32xf32>,
    return
  }
  func.func @transform_0(%arg0: i32, %arg1: i32) -> (i32, i32, i32) {
    %c0_i32 = arith.constant 0 : i32
    %c0_i32_0 = arith.constant 0 : i32
    return %arg0, %arg1, %c0_i32 : i32, i32, i32
  }
  func.func @transform_1(%arg0: i32, %arg1: i32) -> (i32, i32, i32) {
    %c0_i32 = arith.constant 0 : i32
    %c0_i32_0 = arith.constant 0 : i32
    %c0_i32_1 = arith.constant 0 : i32
    return %arg0, %c0_i32, %c0_i32_0 : i32, i32, i32
  }
  func.func @transform_2(%arg0: i32, %arg1: i32) -> (i32, i32, i32) {
    %c0_i32 = arith.constant 0 : i32
    %c0_i32_0 = arith.constant 0 : i32
    %c0_i32_1 = arith.constant 0 : i32
    return %arg0, %c0_i32, %c0_i32_0 : i32, i32, i32
  }
  func.func @transform_3(%arg0: i32, %arg1: i32) -> (i32, i32, i32) {
    %c0_i32 = arith.constant 0 : i32
    %c0_i32_0 = arith.constant 0 : i32
    return %arg0, %arg1, %c0_i32 : i32, i32, i32
  }
  func.func @transform_4(%arg0: i32, %arg1: i32) -> (i32, i32, i32) {
    %c0_i32 = arith.constant 0 : i32
    %c0_i32_0 = arith.constant 0 : i32
    return %arg0, %arg1, %c0_i32 : i32, i32, i32
  }
  func.func @transform_5(%arg0: i32, %arg1: i32) -> (i32, i32, i32) {
    %c0_i32 = arith.constant 0 : i32
    %c0_i32_0 = arith.constant 0 : i32
    return %arg0, %arg1, %c0_i32 : i32, i32, i32
  }
}

</mosaic_0001>

<llo_original>
// kernel: tpu_custom_call.1
$region0: #{tpu_custom_call.1}
  #allocation0 [shape = 'u32[]', space=smem, size = 0x4, offset = 0x4, fixed_abs, tag = 'smem constant byte address 0x4 - core index']
  #allocation1 [shape = 'u32[144,128]{1,0:T(1,128)}', space=vmem, size = 0x12000, scoped, tag = 'internal scratch']
  %s0 = inlined_call_operand.vmem [shape: f32[8,8,32], index: 0, kind: input, shape index: {}]
  %s1 = inlined_call_operand.hbm [shape: f32[8,8,32], index: 1, kind: input, shape index: {}]
  %s2 = inlined_call_operand.hbm [shape: f32[8,8,32], index: 2, kind: input, shape index: {}]
  %s3 = inlined_call_operand.vmem [shape: s32[8,8,8], index: 3, kind: input, shape index: {}]
  %s4 = inlined_call_operand.hbm [shape: f32[8,8,32], index: 4, kind: output, shape index: {0}]
  %s5 = inlined_call_operand.hbm [shape: f32[8,8,8], index: 5, kind: output, shape index: {1}]
  %6 = xla_tuple %s4, %s5
  %s7 = sld [smem:[#allocation0]]
  $region65: #{tpu_custom_call.1} parent=0
    _
  %s9 = ssub.s32 1, %s7
  %s10 = scalar_select 0, %s9, %s7
  $region1: #{tpu_custom_call.1} parent=0
    #allocation2 [shape = 'u8[16384]{0}', space=vmem, size = 0x4000, scoped, tag = 'input window, operand 1']
    #allocation3 [shape = 's32[2]{0}', space=sflag, size = 0x8, scoped, tag = 'scoped memory for tpu_custom_call.1']
    #allocation4 [shape = 's32[2]{0}', space=sflag, size = 0x8, scoped, tag = 'scoped memory for tpu_custom_call.1']
    #allocation5 [shape = 'u8[16384]{0}', space=vmem, size = 0x4000, scoped, tag = 'input window, operand 2']
    #allocation6 [shape = 's32[2]{0}', space=sflag, size = 0x8, scoped, tag = 'scoped memory for tpu_custom_call.1']
    #allocation7 [shape = 'u8[16384]{0}', space=vmem, size = 0x4000, scoped, tag = 'output window, operand 0']
    #allocation8 [shape = 'u8[16384]{0}', space=vmem, size = 0x4000, scoped, tag = 'output window, operand 1']
    #allocation9 [shape = 's32[2]{0}', space=sflag, size = 0x8, scoped, tag = 'scoped memory for tpu_custom_call.1']
    %11 = vsyncpa [#allocation3], 0
    %s12 = scalar_lea.sflag [#allocation3], 1
    %13 = vsyncpa %s12, 0
    %14 = vsyncpa [#allocation6], 0
    %s15 = scalar_lea.sflag [#allocation6], 1
    %16 = vsyncpa %s15, 0
    %17 = vsyncpa [#allocation4], 0
    %s18 = scalar_lea.sflag [#allocation4], 1
    %19 = vsyncpa %s18, 0
    %20 = vsyncpa [#allocation9], 0
    %s21 = scalar_lea.sflag [#allocation9], 1
    %22 = vsyncpa %s21, 0
    loop: start=0, step=1, limit=6
    $region2: #{tpu_custom_call.1} parent=1 // loop_pre_header
      _
    $region3: #{tpu_custom_call.1} parent=1 // loop_header
      %s24 = sphi 0, %s28
      %p25 = scmp.ge.s32.totalorder %s24, 6
      %s31 = sphi 0, %s43
      %s32 = sphi 0, %s39
      %s33 = sphi 0, %s31
      %s34 = sphi 0, %s32
      %s35 = sphi 0, %s33
      %s36 = sphi 0, %s34
      %s48 = sphi 0, %s50
      %s51 = sphi 0, %s48
      %s52 = sphi 0, %s51
      %s68 = sphi 0, %s52
      %s74 = sphi 0, %s76
      %s77 = sphi 0, %s74
      %s78 = sphi 0, %s77
      %s94 = sphi 0, %s78
      %s100 = sphi 0, %s102
      %s103 = sphi 0, %s100
      %s104 = sphi 0, %s103
      %s120 = sphi 0, %s104
      %s128 = sphi 0, %s130
      %s131 = sphi 0, %s128
      %s132 = sphi 0, %s131
      %s148 = sphi 0, %s132
      %s156 = sphi 0, %s158
      %s159 = sphi 0, %s156
      %s160 = sphi 0, %s159
      %s176 = sphi 0, %s160
      %s184 = sphi 0, %s186
      %s187 = sphi 0, %s184
      %s188 = sphi 0, %s187
      %s204 = sphi 0, %s188
    $region4: #{tpu_custom_call.1} parent=1 // loop_header_branch
      %27 = sbr.rel (%p25) target = $region8
    $region5: #{tpu_custom_call.1} parent=1 // loop_body
      %s29 = ssub.s32 %s24, 1
      %s30 = ssub.s32 %s24, 2
      %s37 = sadd.s32 1, %s32
      %p38 = scmp.ge.s32.totalorder %s37, 1
      %s39 = scalar_select %p38, 0, %s37
      %s40 = sadd.s32 1, %s31
      %s41 = scalar_select %p38, %s40, %s31
      %p42 = scmp.ge.s32.totalorder %s41, 4
      %s43 = scalar_select %p42, 0, %s41
      %s44 = ssub.s32 %s31, %s43
      %s45 = ssub.s32 %s32, %s39
      %s46 = sor.u32 %s44, %s45
      %p47 = scmp.eq.s32.totalorder %s46, 0
      %s49 = sadd.s32 %s48, 1
      %s50 = scalar_select %p47, %s48, %s49
      %p53 = pneg %p47
      %p54 = scmp.eq.s32.totalorder %s24, 3
      %p55 = por %p53, %p54
      %p56 = scmp.ne.s32.totalorder %s48, %s51
      %p57 = scmp.eq.s32.totalorder %s24, 0
      %p58 = por %p56, %p57
      %p59 = scmp.ne.s32.totalorder %s48, %s51
      %p60 = scmp.eq.s32.totalorder %s29, 3
      %p61 = por %p59, %p60
      %p62 = scmp.ne.s32.totalorder %s51, %s52
      %p63 = scmp.eq.s32.totalorder %s29, 0
      %p64 = por %p62, %p63
      %p65 = scmp.ne.s32.totalorder %s51, %s52
      %p66 = scmp.eq.s32.totalorder %s30, 3
      %p67 = por %p65, %p66
      %p69 = scmp.ne.s32.totalorder %s52, %s68
      %p70 = scmp.eq.s32.totalorder %s30, 0
      %p71 = por %p69, %p70
      %s72 = ssub.s32 %s31, %s43
      %p73 = scmp.eq.s32.totalorder %s72, 0
      %s75 = sadd.s32 %s74, 1
      %s76 = scalar_select %p73, %s74, %s75
      %p79 = pneg %p73
      %p80 = scmp.eq.s32.totalorder %s24, 3
      %p81 = por %p79, %p80
      %p82 = scmp.ne.s32.totalorder %s74, %s77
      %p83 = scmp.eq.s32.totalorder %s24, 0
      %p84 = por %p82, %p83
      %p85 = scmp.ne.s32.totalorder %s74, %s77
      %p86 = scmp.eq.s32.totalorder %s29, 3
      %p87 = por %p85, %p86
      %p88 = scmp.ne.s32.totalorder %s77, %s78
      %p89 = scmp.eq.s32.totalorder %s29, 0
      %p90 = por %p88, %p89
      %p91 = scmp.ne.s32.totalorder %s77, %s78
      %p92 = scmp.eq.s32.totalorder %s30, 3
      %p93 = por %p91, %p92
      %p95 = scmp.ne.s32.totalorder %s78, %s94
      %p96 = scmp.eq.s32.totalorder %s30, 0
      %p97 = por %p95, %p96
      %s98 = ssub.s32 %s31, %s43
      %p99 = scmp.eq.s32.totalorder %s98, 0
      %s101 = sadd.s32 %s100, 1
      %s102 = scalar_select %p99, %s100, %s101
      %p105 = pneg %p99
      %p106 = scmp.eq.s32.totalorder %s24, 3
      %p107 = por %p105, %p106
      %p108 = scmp.ne.s32.totalorder %s100, %s103
      %p109 = scmp.eq.s32.totalorder %s24, 0
      %p110 = por %p108, %p109
      %p111 = scmp.ne.s32.totalorder %s100, %s103
      %p112 = scmp.eq.s32.totalorder %s29, 3
      %p113 = por %p111, %p112
      %p114 = scmp.ne.s32.totalorder %s103, %s104
      %p115 = scmp.eq.s32.totalorder %s29, 0
      %p116 = por %p114, %p115
      %p117 = scmp.ne.s32.totalorder %s103, %s104
      %p118 = scmp.eq.s32.totalorder %s30, 3
      %p119 = por %p117, %p118
      %p121 = scmp.ne.s32.totalorder %s104, %s120
      %p122 = scmp.eq.s32.totalorder %s30, 0
      %p123 = por %p121, %p122
      %s124 = ssub.s32 %s31, %s43
      %s125 = ssub.s32 %s32, %s39
      %s126 = sor.u32 %s124, %s125
      %p127 = scmp.eq.s32.totalorder %s126, 0
      %s129 = sadd.s32 %s128, 1
      %s130 = scalar_select %p127, %s128, %s129
      %p133 = pneg %p127
      %p134 = scmp.eq.s32.totalorder %s24, 3
      %p135 = por %p133, %p134
      %p136 = scmp.ne.s32.totalorder %s128, %s131
      %p137 = scmp.eq.s32.totalorder %s24, 0
      %p138 = por %p136, %p137
      %p139 = scmp.ne.s32.totalorder %s128, %s131
      %p140 = scmp.eq.s32.totalorder %s29, 3
      %p141 = por %p139, %p140
      %p142 = scmp.ne.s32.totalorder %s131, %s132
      %p143 = scmp.eq.s32.totalorder %s29, 0
      %p144 = por %p142, %p143
      %p145 = scmp.ne.s32.totalorder %s131, %s132
      %p146 = scmp.eq.s32.totalorder %s30, 3
      %p147 = por %p145, %p146
      %p149 = scmp.ne.s32.totalorder %s132, %s148
      %p150 = scmp.eq.s32.totalorder %s30, 0
      %p151 = por %p149, %p150
      %s152 = ssub.s32 %s31, %s43
      %s153 = ssub.s32 %s32, %s39
      %s154 = sor.u32 %s152, %s153
      %p155 = scmp.eq.s32.totalorder %s154, 0
      %s157 = sadd.s32 %s156, 1
      %s158 = scalar_select %p155, %s156, %s157
      %p161 = pneg %p155
      %p162 = scmp.eq.s32.totalorder %s24, 3
      %p163 = por %p161, %p162
      %p164 = scmp.ne.s32.totalorder %s156, %s159
      %p165 = scmp.eq.s32.totalorder %s24, 0
      %p166 = por %p164, %p165
      %p167 = scmp.ne.s32.totalorder %s156, %s159
      %p168 = scmp.eq.s32.totalorder %s29, 3
      %p169 = por %p167, %p168
      %p170 = scmp.ne.s32.totalorder %s159, %s160
      %p171 = scmp.eq.s32.totalorder %s29, 0
      %p172 = por %p170, %p171
      %p173 = scmp.ne.s32.totalorder %s159, %s160
      %p174 = scmp.eq.s32.totalorder %s30, 3
      %p175 = por %p173, %p174
      %p177 = scmp.ne.s32.totalorder %s160, %s176
      %p178 = scmp.eq.s32.totalorder %s30, 0
      %p179 = por %p177, %p178
      %s180 = ssub.s32 %s31, %s43
      %s181 = ssub.s32 %s32, %s39
      %s182 = sor.u32 %s180, %s181
      %p183 = scmp.eq.s32.totalorder %s182, 0
      %s185 = sadd.s32 %s184, 1
      %s186 = scalar_select %p183, %s184, %s185
      %p189 = pneg %p183
      %p190 = scmp.eq.s32.totalorder %s24, 3
      %p191 = por %p189, %p190
      %p192 = scmp.ne.s32.totalorder %s184, %s187
      %p193 = scmp.eq.s32.totalorder %s24, 0
      %p194 = por %p192, %p193
      %p195 = scmp.ne.s32.totalorder %s184, %s187
      %p196 = scmp.eq.s32.totalorder %s29, 3
      %p197 = por %p195, %p196
      %p198 = scmp.ne.s32.totalorder %s187, %s188
      %p199 = scmp.eq.s32.totalorder %s29, 0
      %p200 = por %p198, %p199
      %p201 = scmp.ne.s32.totalorder %s187, %s188
      %p202 = scmp.eq.s32.totalorder %s30, 3
      %p203 = por %p201, %p202
      %p205 = scmp.ne.s32.totalorder %s188, %s204
      %p206 = scmp.eq.s32.totalorder %s30, 0
      %p207 = por %p205, %p206
      %p208 = scmp.le.s32.totalorder 1, %s24
      %p209 = scmp.lt.s32.totalorder %s24, 5
      %p210 = pnand %p208, %p209
      %p211 = pneg %p210
      // Predicated region
      $region9: #{tpu_custom_call.1} parent=5 // pred_check
        _
      $region10: #{tpu_custom_call.1} parent=5 // pred_check_branch
        %213 = sbr.rel (%p210) target = $region12
      $region11: #{tpu_custom_call.1} parent=5 // pred_region
        %s214 = ssub.s32 %s24, 1
      $region12: #{tpu_custom_call.1} parent=5 // pred_fallthru
        _
      %p215 = scmp.lt.s32.totalorder %s24, 4
      // Predicated region
      $region13: #{tpu_custom_call.1} parent=5 // pred_check
        %p216 = pneg %p215
      $region14: #{tpu_custom_call.1} parent=5 // pred_check_branch
        %218 = sbr.rel (%p216) target = $region16
      $region15: #{tpu_custom_call.1} parent=5 // pred_region
        // Predicated region
        $region17: #{tpu_custom_call.1} parent=15 // pred_check
          %p219 = pneg %p58
        $region18: #{tpu_custom_call.1} parent=15 // pred_check_branch
          %221 = sbr.rel (%p219) target = $region20
        $region19: #{tpu_custom_call.1} parent=15 // pred_region
          %s222 = smul.u32 2, %s31
          %p223 = scmp.lt.s32.totalorder %s222, 7
          %s224 = scalar_select %p223, %s222, 7
          %p225 = scmp.lt.s32.totalorder %s32, 0
          %s226 = scalar_select %p225, %s32, 0
          %s227 = sadd.s32 %s226, %s224
          %s228 = smul.addr %s227, 8
          %s229 = scalar_lea.vmem %s0, %s228
          %s230 = smul.u32 2, %s31
        $region20: #{tpu_custom_call.1} parent=15 // pred_fallthru
          _
        // Predicated region
        $region21: #{tpu_custom_call.1} parent=15 // pred_check
          %p231 = pneg %p84
        $region22: #{tpu_custom_call.1} parent=15 // pred_check_branch
          %233 = sbr.rel (%p231) target = $region24
        $region23: #{tpu_custom_call.1} parent=15 // pred_region
          %s234 = sand.u32 %s74, 1
          %s235 = scalar_lea.sflag [#allocation3], %s234
          %s236 = sand.u32 %s74, 1
          %s237 = smul.addr %s236, 16
          %s238 = scalar_lea.vmem [#allocation2], %s237
          %s239 = smul.u32 2, %s31
          %s241 = ssub.s32 256, 256
          %242 = vsyncadd %s235, %s241
          %s243 = smul.addr %s239, 128
          %s244 = scalar_lea.hbm %s1, %s243
          %s245 = sshll.u32 %s238, 4
          %s246 = int_to_ptr.vmem [resolvable:$true] %s245
          %251 = dma.hbm_to_vmem [thread:$0]  %s244, 256, %s246, %s235, 128, 128, 8
        $region24: #{tpu_custom_call.1} parent=15 // pred_fallthru
          _
        // Predicated region
        $region25: #{tpu_custom_call.1} parent=15 // pred_check
          %p252 = pneg %p110
        $region26: #{tpu_custom_call.1} parent=15 // pred_check_branch
          %254 = sbr.rel (%p252) target = $region28
        $region27: #{tpu_custom_call.1} parent=15 // pred_region
          %s255 = sand.u32 %s100, 1
          %s256 = scalar_lea.sflag [#allocation6], %s255
          %s257 = sand.u32 %s100, 1
          %s258 = smul.addr %s257, 16
          %s259 = scalar_lea.vmem [#allocation5], %s258
          %s260 = smul.u32 2, %s31
          %s262 = ssub.s32 256, 256
          %263 = vsyncadd %s256, %s262
          %s264 = smul.addr %s260, 128
          %s265 = scalar_lea.hbm %s2, %s264
          %s266 = sshll.u32 %s259, 4
          %s267 = int_to_ptr.vmem [resolvable:$true] %s266
          %272 = dma.hbm_to_vmem [thread:$0]  %s265, 256, %s267, %s256, 128, 128, 8
        $region28: #{tpu_custom_call.1} parent=15 // pred_fallthru
          _
        // Predicated region
        $region29: #{tpu_custom_call.1} parent=15 // pred_check
          %p273 = pneg %p138
        $region30: #{tpu_custom_call.1} parent=15 // pred_check_branch
          %275 = sbr.rel (%p273) target = $region32
        $region31: #{tpu_custom_call.1} parent=15 // pred_region
          %s276 = smul.u32 2, %s31
          %p277 = scmp.lt.s32.totalorder %s276, 7
          %s278 = scalar_select %p277, %s276, 7
          %p279 = scmp.lt.s32.totalorder %s32, 0
          %s280 = scalar_select %p279, %s32, 0
          %s281 = sadd.s32 %s280, %s278
          %s282 = smul.addr %s281, 8
          %s283 = scalar_lea.vmem %s3, %s282
          %s284 = smul.u32 2, %s31
        $region32: #{tpu_custom_call.1} parent=15 // pred_fallthru
          _
      $region16: #{tpu_custom_call.1} parent=5 // pred_fallthru
        _
      %p285 = scmp.le.s32.totalorder 1, %s24
      %p286 = scmp.lt.s32.totalorder %s24, 5
      %p287 = pnand %p285, %p286
      %p288 = pneg %p287
      // Predicated region
      $region33: #{tpu_custom_call.1} parent=5 // pred_check
        _
      $region34: #{tpu_custom_call.1} parent=5 // pred_check_branch
        %290 = sbr.rel (%p287) target = $region36
      $region35: #{tpu_custom_call.1} parent=5 // pred_region
        %s291 = ssub.s32 %s24, 1
        %s292 = sand.u32 %s77, 1
        %s293 = scalar_lea.sflag [#allocation3], %s292
        %s294 = sand.u32 %s77, 1
        %s295 = smul.addr %s294, 16
        %s296 = scalar_lea.vmem [#allocation2], %s295
        // Predicated region
        $region37: #{tpu_custom_call.1} parent=35 // pred_check
          %p297 = pneg %p90
        $region38: #{tpu_custom_call.1} parent=35 // pred_check_branch
          %299 = sbr.rel (%p297) target = $region40
        $region39: #{tpu_custom_call.1} parent=35 // pred_region
          %300 = dma.done %s293, 256
        $region40: #{tpu_custom_call.1} parent=35 // pred_fallthru
          _
        %s301 = sand.u32 %s103, 1
        %s302 = scalar_lea.sflag [#allocation6], %s301
        %s303 = sand.u32 %s103, 1
        %s304 = smul.addr %s303, 16
        %s305 = scalar_lea.vmem [#allocation5], %s304
        // Predicated region
        $region41: #{tpu_custom_call.1} parent=35 // pred_check
          %p306 = pneg %p116
        $region42: #{tpu_custom_call.1} parent=35 // pred_check_branch
          %308 = sbr.rel (%p306) target = $region44
        $region43: #{tpu_custom_call.1} parent=35 // pred_region
          %309 = dma.done %s302, 256
        $region44: #{tpu_custom_call.1} parent=35 // pred_fallthru
          _
        %s310 = smul.u32 2, %s33
        %p311 = scmp.lt.s32.totalorder %s310, 7
        %s312 = scalar_select %p311, %s310, 7
        %p313 = scmp.lt.s32.totalorder %s34, 0
        %s314 = scalar_select %p313, %s34, 0
        %s315 = sadd.s32 %s314, %s312
        %s316 = smul.addr %s315, 8
        %s317 = scalar_lea.vmem %s0, %s316
        %p318 = pneg %p64
        %p319 = pneg %p61
        %s320 = sand.u32 %s77, 1
        %s321 = scalar_lea.sflag [#allocation3], %s320
        %s322 = sand.u32 %s77, 1
        %s323 = smul.addr %s322, 16
        %s324 = scalar_lea.vmem [#allocation2], %s323
        %p325 = pneg %p90
        %p326 = pneg %p87
        %s327 = sand.u32 %s103, 1
        %s328 = scalar_lea.sflag [#allocation6], %s327
        %s329 = sand.u32 %s103, 1
        %s330 = smul.addr %s329, 16
        %s331 = scalar_lea.vmem [#allocation5], %s330
        %p332 = pneg %p116
        %p333 = pneg %p113
        %s334 = smul.u32 2, %s33
        %p335 = scmp.lt.s32.totalorder %s334, 7
        %s336 = scalar_select %p335, %s334, 7
        %p337 = scmp.lt.s32.totalorder %s34, 0
        %s338 = scalar_select %p337, %s34, 0
        %s339 = sadd.s32 %s338, %s336
        %s340 = smul.addr %s339, 8
        %s341 = scalar_lea.vmem %s3, %s340
        %p342 = pneg %p144
        %p343 = pneg %p141
        %p344 = pneg %p172
        %p345 = pneg %p169
        %s346 = sand.u32 %s159, 1
        %s347 = scalar_lea.sflag [#allocation4], %s346
        %s348 = sand.u32 %s159, 1
        %s349 = smul.addr %s348, 16
        %s350 = scalar_lea.vmem [#allocation7], %s349
        %p351 = pneg %p200
        %p352 = pneg %p197
        %s353 = sand.u32 %s187, 1
        %s354 = scalar_lea.sflag [#allocation9], %s353
        %s355 = sand.u32 %s187, 1
        %s356 = smul.addr %s355, 16
        %s357 = scalar_lea.vmem [#allocation8], %s356
        %s358 = smul.u32 2, %s33
        %p359 = scmp.lt.s32.totalorder %s358, 7
        %s360 = scalar_select %p359, %s358, 7
        %p361 = scmp.lt.s32.totalorder %s34, 0
        %s362 = scalar_select %p361, %s34, 0
        %s363 = sadd.s32 %s362, %s360
        %s364 = smul.addr %s363, 8
        %s365 = scalar_lea.vmem %s0, %s364
        %s366 = smul.u32 2, %s33
        %s367 = smul.u32 2, %s33
        %s368 = smul.u32 2, %s33
        %s369 = smul.u32 2, %s33
        %p370 = scmp.lt.s32.totalorder %s369, 7
        %s371 = scalar_select %p370, %s369, 7
        %p372 = scmp.lt.s32.totalorder %s34, 0
        %s373 = scalar_select %p372, %s34, 0
        %s374 = sadd.s32 %s373, %s371
        %s375 = smul.addr %s374, 8
        %s376 = scalar_lea.vmem %s3, %s375
        %s377 = smul.u32 2, %s33
        %s378 = smul.u32 2, %s33
        %s379 = smul.u32 2, %s33
        %v380 = vld [vmem:[%s365] sm:$0xff]
        %v381 = vld [vmem:[%s365 + $0x8] sm:$0xff]
        %v382 = vmul.f32 %v380, 0.17677669
        %v383 = vmul.f32 %v381, 0.17677669
        %v384 = vld [vmem:[%s296] sm:$0xff]
        %v385 = vld [vmem:[%s296 + $0x8] sm:$0xff]
        %v386 = vld [vmem:[%s305] sm:$0xff]
        %v387 = vld [vmem:[%s305 + $0x8] sm:$0xff]
        %v388 = vld [vmem:[%s376] sm:$0xff]
        %v389 = vld [vmem:[%s376 + $0x8] sm:$0xff]
        %vm390 = vcmp.ne.s32.totalorder %v388, 0
        %vm391 = vcmp.ne.s32.totalorder %v389, 0
        %vm392 = vcmask 261120
        %v394 = vsel %vm392, %v382, 0
        %v397 = vsel %vm392, %v384, 0
        %399 = vmatprep.subr.mxu0 0.0
        %400 = vmatpush1.xpose.msra.mxu0 %v397
        %401 = vmatprep.subr.mxu0 0.0
        %402 = vmatpush1.xpose.msra.mxu0 0.0
        %403 = vmatprep.subr.mxu0 0.0
        %404 = vmatpush1.xpose.msra.mxu0 0.0
        %405 = vmatprep.subr.mxu0 0.0
        %406 = vmatpush1.xpose.msra.mxu0 0.0
        %407 = vmatprep.subr.mxu0 0.0
        %408 = vmatpush1.xpose.msra.mxu0 0.0
        %409 = vmatprep.subr.mxu0 0.0
        %410 = vmatpush1.xpose.msra.mxu0 0.0
        %411 = vmatprep.subr.mxu0 0.0
        %412 = vmatpush1.xpose.msra.mxu0 0.0
        %413 = vmatprep.subr.mxu0 0.0
        %414 = vmatpush1.xpose.msra.mxu0 0.0
        %415 = vmatprep.subr.mxu0 0.0
        %416 = vmatpush1.xpose.msra.mxu0 0.0
        %417 = vmatprep.subr.mxu0 0.0
        %418 = vmatpush1.xpose.msra.mxu0 0.0
        %419 = vmatprep.subr.mxu0 0.0
        %420 = vmatpush1.xpose.msra.mxu0 0.0
        %421 = vmatprep.subr.mxu0 0.0
        %422 = vmatpush1.xpose.msra.mxu0 0.0
        %423 = vmatprep.subr.mxu0 0.0
        %424 = vmatpush1.xpose.msra.mxu0 0.0
        %425 = vmatprep.subr.mxu0 0.0
        %426 = vmatpush1.xpose.msra.mxu0 0.0
        %427 = vmatprep.subr.mxu0 0.0
        %428 = vmatpush1.xpose.msra.mxu0 0.0
        %429 = vmatprep.subr.mxu0 0.0
        %430 = vmatpush1.xpose.msra.mxu0 0.0
        %431 = vmatprep.subr.mxu0 0.0
        %432 = vmatpush1.xpose.msra.mxu0 0.0
        %433 = vmatprep.subr.mxu0 0.0
        %434 = vmatpush1.xpose.msra.mxu0 0.0
        %435 = vmatprep.subr.mxu0 0.0
        %436 = vmatpush1.xpose.msra.mxu0 0.0
        %437 = vmatprep.subr.mxu0 0.0
        %438 = vmatpush1.xpose.msra.mxu0 0.0
        %439 = vmatprep.subr.mxu0 0.0
        %440 = vmatpush1.xpose.msra.mxu0 0.0
        %441 = vmatprep.subr.mxu0 0.0
        %442 = vmatpush1.xpose.msra.mxu0 0.0
        %443 = vmatprep.subr.mxu0 0.0
        %444 = vmatpush1.xpose.msra.mxu0 0.0
        %445 = vmatprep.subr.mxu0 0.0
        %446 = vmatpush1.xpose.msra.mxu0 0.0
        %447 = vmatprep.subr.mxu0 0.0
        %448 = vmatpush1.xpose.msra.mxu0 0.0
        %449 = vmatprep.subr.mxu0 0.0
        %450 = vmatpush1.xpose.msra.mxu0 0.0
        %451 = vmatprep.subr.mxu0 0.0
        %452 = vmatpush1.xpose.msra.mxu0 0.0
        %453 = vmatprep.subr.mxu0 0.0
        %454 = vmatpush1.xpose.msra.mxu0 0.0
        %455 = vmatprep.subr.mxu0 0.0
        %456 = vmatpush1.xpose.msra.mxu0 0.0
        %457 = vmatprep.subr.mxu0 0.0
        %458 = vmatpush1.xpose.msra.mxu0 0.0
        %459 = vmatprep.subr.mxu0 0.0
        %460 = vmatpush1.xpose.msra.mxu0 0.0
        %461 = vmatprep.subr.mxu0 0.0
        %462 = vmatpush1.xpose.msra.mxu0 0.0
        %463 = vmatprep.mubr.f32.mxu0 0.0
        %464 = vmatmul.mubr.f32.gmra.mrb[0].mxu0 %v394
        %v465 = vpop.f32.mrb[0].mxu0
        %v466 = vadd.f32 0.0, %v465
        %v467 = vpop.f32.mrb[0].mxu0
        %468 = vdwg.mxu0
        %v470 = vsel %vm392, %v383, 0
        %v473 = vsel %vm392, %v385, 0
        %475 = vmatprep.subr.mxu0 0.0
        %476 = vmatpush1.xpose.msra.mxu0 %v473
        %477 = vmatprep.subr.mxu0 0.0
        %478 = vmatpush1.xpose.msra.mxu0 0.0
        %479 = vmatprep.subr.mxu0 0.0
        %480 = vmatpush1.xpose.msra.mxu0 0.0
        %481 = vmatprep.subr.mxu0 0.0
        %482 = vmatpush1.xpose.msra.mxu0 0.0
        %483 = vmatprep.subr.mxu0 0.0
        %484 = vmatpush1.xpose.msra.mxu0 0.0
        %485 = vmatprep.subr.mxu0 0.0
        %486 = vmatpush1.xpose.msra.mxu0 0.0
        %487 = vmatprep.subr.mxu0 0.0
        %488 = vmatpush1.xpose.msra.mxu0 0.0
        %489 = vmatprep.subr.mxu0 0.0
        %490 = vmatpush1.xpose.msra.mxu0 0.0
        %491 = vmatprep.subr.mxu0 0.0
        %492 = vmatpush1.xpose.msra.mxu0 0.0
        %493 = vmatprep.subr.mxu0 0.0
        %494 = vmatpush1.xpose.msra.mxu0 0.0
        %495 = vmatprep.subr.mxu0 0.0
        %496 = vmatpush1.xpose.msra.mxu0 0.0
        %497 = vmatprep.subr.mxu0 0.0
        %498 = vmatpush1.xpose.msra.mxu0 0.0
        %499 = vmatprep.subr.mxu0 0.0
        %500 = vmatpush1.xpose.msra.mxu0 0.0
        %501 = vmatprep.subr.mxu0 0.0
        %502 = vmatpush1.xpose.msra.mxu0 0.0
        %503 = vmatprep.subr.mxu0 0.0
        %504 = vmatpush1.xpose.msra.mxu0 0.0
        %505 = vmatprep.subr.mxu0 0.0
        %506 = vmatpush1.xpose.msra.mxu0 0.0
        %507 = vmatprep.subr.mxu0 0.0
        %508 = vmatpush1.xpose.msra.mxu0 0.0
        %509 = vmatprep.subr.mxu0 0.0
        %510 = vmatpush1.xpose.msra.mxu0 0.0
        %511 = vmatprep.subr.mxu0 0.0
        %512 = vmatpush1.xpose.msra.mxu0 0.0
        %513 = vmatprep.subr.mxu0 0.0
        %514 = vmatpush1.xpose.msra.mxu0 0.0
        %515 = vmatprep.subr.mxu0 0.0
        %516 = vmatpush1.xpose.msra.mxu0 0.0
        %517 = vmatprep.subr.mxu0 0.0
        %518 = vmatpush1.xpose.msra.mxu0 0.0
        %519 = vmatprep.subr.mxu0 0.0
        %520 = vmatpush1.xpose.msra.mxu0 0.0
        %521 = vmatprep.subr.mxu0 0.0
        %522 = vmatpush1.xpose.msra.mxu0 0.0
        %523 = vmatprep.subr.mxu0 0.0
        %524 = vmatpush1.xpose.msra.mxu0 0.0
        %525 = vmatprep.subr.mxu0 0.0
        %526 = vmatpush1.xpose.msra.mxu0 0.0
        %527 = vmatprep.subr.mxu0 0.0
        %528 = vmatpush1.xpose.msra.mxu0 0.0
        %529 = vmatprep.subr.mxu0 0.0
        %530 = vmatpush1.xpose.msra.mxu0 0.0
        %531 = vmatprep.subr.mxu0 0.0
        %532 = vmatpush1.xpose.msra.mxu0 0.0
        %533 = vmatprep.subr.mxu0 0.0
        %534 = vmatpush1.xpose.msra.mxu0 0.0
        %535 = vmatprep.subr.mxu0 0.0
        %536 = vmatpush1.xpose.msra.mxu0 0.0
        %537 = vmatprep.subr.mxu0 0.0
        %538 = vmatpush1.xpose.msra.mxu0 0.0
        %539 = vmatprep.mubr.f32.mxu0 0.0
        %540 = vmatmul.mubr.f32.gmra.mrb[0].mxu0 %v470
        %v541 = vpop.f32.mrb[0].mxu0
        %v542 = vadd.f32 0.0, %v541
        %v543 = vpop.f32.mrb[0].mxu0
        %544 = vdwg.mxu0
        %v545 = vsel %vm390, -1e+09, %v466
        %v546 = vsel %vm391, -1e+09, %v542
        %vm547 = vcmask 64512
        %v548 = vsel %vm547, %v545, -inf
        %549 = vmax.xlane.f32.xlu0 %v548
        %v550 = vpop.xlane.xlu0 %549
        %v551 = vsel %vm547, %v546, -inf
        %552 = vmax.xlane.f32.xlu0 %v551
        %v553 = vpop.xlane.xlu0 %552
        %v554 = vsub.f32 %v545, %v550
        %v555 = vsub.f32 %v546, %v553
        %v556 = vmul.f32 %v554, 1.442695
        %v557 = vpow.pop %v556
        %v558 = vmul.f32 %v555, 1.442695
        %v559 = vpow.pop %v558
        %v560 = vsel %vm547, %v557, 0.0
        %561 = vadd.xlane.f32.xlu0 %v560
        %v562 = vpop.xlane.xlu0 %561
        %v563 = vsel %vm547, %v559, 0.0
        %564 = vadd.xlane.f32.xlu0 %v563
        %v565 = vpop.xlane.xlu0 %564
        %v566 = vrcp.pop %v562
        %v567 = vrcp.pop %v565
        %v568 = vmul.f32 %v562, %v566
        %v569 = vmul.f32 %v565, %v567
        %v570 = vsub.f32 2.0, %v568
        %v571 = vsub.f32 2.0, %v569
        %v572 = vmul.f32 %v566, %v570
        %v573 = vmul.f32 %v567, %v571
        %v574 = vmul.f32 %v557, %v572
        %v575 = vmul.f32 %v559, %v573
        %576 = vst.msk [vmem:[%s357] sm:$0xff] %vm547, %v574
        %577 = vst.msk [vmem:[%s357 + $0x8] sm:$0xff] %vm547, %v575
        %v579 = vsel %vm547, %v574, 0
        %581 = vmatprep.subr.mxu0 0.0
        %582 = vmatpush1.msra.mxu0 %v386
        %583 = vmatprep.subr.mxu0 0.0
        %584 = vmatpush1.msra.mxu0 0.0
        %585 = vmatprep.subr.mxu0 0.0
        %586 = vmatpush1.msra.mxu0 0.0
        %587 = vmatprep.subr.mxu0 0.0
        %588 = vmatpush1.msra.mxu0 0.0
        %589 = vmatprep.subr.mxu0 0.0
        %590 = vmatpush1.msra.mxu0 0.0
        %591 = vmatprep.subr.mxu0 0.0
        %592 = vmatpush1.msra.mxu0 0.0
        %593 = vmatprep.subr.mxu0 0.0
        %594 = vmatpush1.msra.mxu0 0.0
        %595 = vmatprep.subr.mxu0 0.0
        %596 = vmatpush1.msra.mxu0 0.0
        %597 = vmatprep.subr.mxu0 0.0
        %598 = vmatpush1.msra.mxu0 0.0
        %599 = vmatprep.subr.mxu0 0.0
        %600 = vmatpush1.msra.mxu0 0.0
        %601 = vmatprep.subr.mxu0 0.0
        %602 = vmatpush1.msra.mxu0 0.0
        %603 = vmatprep.subr.mxu0 0.0
        %604 = vmatpush1.msra.mxu0 0.0
        %605 = vmatprep.subr.mxu0 0.0
        %606 = vmatpush1.msra.mxu0 0.0
        %607 = vmatprep.subr.mxu0 0.0
        %608 = vmatpush1.msra.mxu0 0.0
        %609 = vmatprep.subr.mxu0 0.0
        %610 = vmatpush1.msra.mxu0 0.0
        %611 = vmatprep.subr.mxu0 0.0
        %612 = vmatpush1.msra.mxu0 0.0
        %613 = vmatprep.subr.mxu0 0.0
        %614 = vmatpush1.msra.mxu0 0.0
        %615 = vmatprep.subr.mxu0 0.0
        %616 = vmatpush1.msra.mxu0 0.0
        %617 = vmatprep.subr.mxu0 0.0
        %618 = vmatpush1.msra.mxu0 0.0
        %619 = vmatprep.subr.mxu0 0.0
        %620 = vmatpush1.msra.mxu0 0.0
        %621 = vmatprep.subr.mxu0 0.0
        %622 = vmatpush1.msra.mxu0 0.0
        %623 = vmatprep.subr.mxu0 0.0
        %624 = vmatpush1.msra.mxu0 0.0
        %625 = vmatprep.subr.mxu0 0.0
        %626 = vmatpush1.msra.mxu0 0.0
        %627 = vmatprep.subr.mxu0 0.0
        %628 = vmatpush1.msra.mxu0 0.0
        %629 = vmatprep.subr.mxu0 0.0
        %630 = vmatpush1.msra.mxu0 0.0
        %631 = vmatprep.subr.mxu0 0.0
        %632 = vmatpush1.msra.mxu0 0.0
        %633 = vmatprep.subr.mxu0 0.0
        %634 = vmatpush1.msra.mxu0 0.0
        %635 = vmatprep.subr.mxu0 0.0
        %636 = vmatpush1.msra.mxu0 0.0
        %637 = vmatprep.subr.mxu0 0.0
        %638 = vmatpush1.msra.mxu0 0.0
        %639 = vmatprep.subr.mxu0 0.0
        %640 = vmatpush1.msra.mxu0 0.0
        %641 = vmatprep.subr.mxu0 0.0
        %642 = vmatpush1.msra.mxu0 0.0
        %643 = vmatprep.subr.mxu0 0.0
        %644 = vmatpush1.msra.mxu0 0.0
        %645 = vmatprep.mubr.f32.mxu0 0.0
        %646 = vmatmul.mubr.f32.gmra.mrb[0].mxu0 %v579
        %v647 = vpop.f32.mrb[0].mxu0
        %v648 = vadd.f32 0.0, %v647
        %v649 = vpop.f32.mrb[0].mxu0
        %650 = vdwg.mxu0
        %v652 = vsel %vm547, %v575, 0
        %654 = vmatprep.subr.mxu0 0.0
        %655 = vmatpush1.msra.mxu0 %v387
        %656 = vmatprep.subr.mxu0 0.0
        %657 = vmatpush1.msra.mxu0 0.0
        %658 = vmatprep.subr.mxu0 0.0
        %659 = vmatpush1.msra.mxu0 0.0
        %660 = vmatprep.subr.mxu0 0.0
        %661 = vmatpush1.msra.mxu0 0.0
        %662 = vmatprep.subr.mxu0 0.0
        %663 = vmatpush1.msra.mxu0 0.0
        %664 = vmatprep.subr.mxu0 0.0
        %665 = vmatpush1.msra.mxu0 0.0
        %666 = vmatprep.subr.mxu0 0.0
        %667 = vmatpush1.msra.mxu0 0.0
        %668 = vmatprep.subr.mxu0 0.0
        %669 = vmatpush1.msra.mxu0 0.0
        %670 = vmatprep.subr.mxu0 0.0
        %671 = vmatpush1.msra.mxu0 0.0
        %672 = vmatprep.subr.mxu0 0.0
        %673 = vmatpush1.msra.mxu0 0.0
        %674 = vmatprep.subr.mxu0 0.0
        %675 = vmatpush1.msra.mxu0 0.0
        %676 = vmatprep.subr.mxu0 0.0
        %677 = vmatpush1.msra.mxu0 0.0
        %678 = vmatprep.subr.mxu0 0.0
        %679 = vmatpush1.msra.mxu0 0.0
        %680 = vmatprep.subr.mxu0 0.0
        %681 = vmatpush1.msra.mxu0 0.0
        %682 = vmatprep.subr.mxu0 0.0
        %683 = vmatpush1.msra.mxu0 0.0
        %684 = vmatprep.subr.mxu0 0.0
        %685 = vmatpush1.msra.mxu0 0.0
        %686 = vmatprep.subr.mxu0 0.0
        %687 = vmatpush1.msra.mxu0 0.0
        %688 = vmatprep.subr.mxu0 0.0
        %689 = vmatpush1.msra.mxu0 0.0
        %690 = vmatprep.subr.mxu0 0.0
        %691 = vmatpush1.msra.mxu0 0.0
        %692 = vmatprep.subr.mxu0 0.0
        %693 = vmatpush1.msra.mxu0 0.0
        %694 = vmatprep.subr.mxu0 0.0
        %695 = vmatpush1.msra.mxu0 0.0
        %696 = vmatprep.subr.mxu0 0.0
        %697 = vmatpush1.msra.mxu0 0.0
        %698 = vmatprep.subr.mxu0 0.0
        %699 = vmatpush1.msra.mxu0 0.0
        %700 = vmatprep.subr.mxu0 0.0
        %701 = vmatpush1.msra.mxu0 0.0
        %702 = vmatprep.subr.mxu0 0.0
        %703 = vmatpush1.msra.mxu0 0.0
        %704 = vmatprep.subr.mxu0 0.0
        %705 = vmatpush1.msra.mxu0 0.0
        %706 = vmatprep.subr.mxu0 0.0
        %707 = vmatpush1.msra.mxu0 0.0
        %708 = vmatprep.subr.mxu0 0.0
        %709 = vmatpush1.msra.mxu0 0.0
        %710 = vmatprep.subr.mxu0 0.0
        %711 = vmatpush1.msra.mxu0 0.0
        %712 = vmatprep.subr.mxu0 0.0
        %713 = vmatpush1.msra.mxu0 0.0
        %714 = vmatprep.subr.mxu0 0.0
        %715 = vmatpush1.msra.mxu0 0.0
        %716 = vmatprep.subr.mxu0 0.0
        %717 = vmatpush1.msra.mxu0 0.0
        %718 = vmatprep.mubr.f32.mxu0 0.0
        %719 = vmatmul.mubr.f32.gmra.mrb[0].mxu0 %v652
        %v720 = vpop.f32.mrb[0].mxu0
        %v721 = vadd.f32 0.0, %v720
        %v722 = vpop.f32.mrb[0].mxu0
        %723 = vdwg.mxu0
        %724 = vst.msk [vmem:[%s350] sm:$0xff] %vm392, %v648
        %725 = vst.msk [vmem:[%s350 + $0x8] sm:$0xff] %vm392, %v721
        %s726 = sand.u32 %s159, 1
        %s727 = scalar_lea.sflag [#allocation4], %s726
        %s728 = sand.u32 %s159, 1
        %s729 = smul.addr %s728, 16
        %s730 = scalar_lea.vmem [#allocation7], %s729
        %s731 = sand.u32 %s187, 1
        %s732 = scalar_lea.sflag [#allocation9], %s731
        %s733 = sand.u32 %s187, 1
        %s734 = smul.addr %s733, 16
        %s735 = scalar_lea.vmem [#allocation8], %s734
        // Predicated region
        $region45: #{tpu_custom_call.1} parent=35 // pred_check
          %p736 = pneg %p169
        $region46: #{tpu_custom_call.1} parent=35 // pred_check_branch
          %738 = sbr.rel (%p736) target = $region48
        $region47: #{tpu_custom_call.1} parent=35 // pred_region
          %s739 = smul.u32 2, %s33
          %s741 = ssub.s32 256, 256
          %742 = vsyncadd %s727, %s741
          %s743 = sadd.s32 %s34, %s739
          %s744 = smul.addr %s743, 128
          %s745 = scalar_lea.hbm %s4, %s744
          %s746 = sshll.u32 %s730, 4
          %s747 = int_to_ptr.vmem [resolvable:$true] %s746
          %752 = dma.vmem_to_hbm [thread:$0]  %s747, 256, %s745, %s727, 128, 128, 8
        $region48: #{tpu_custom_call.1} parent=35 // pred_fallthru
          _
        // Predicated region
        $region49: #{tpu_custom_call.1} parent=35 // pred_check
          %p753 = pneg %p197
        $region50: #{tpu_custom_call.1} parent=35 // pred_check_branch
          %755 = sbr.rel (%p753) target = $region52
        $region51: #{tpu_custom_call.1} parent=35 // pred_region
          %s756 = smul.u32 2, %s33
          %s758 = ssub.s32 256, 256
          %759 = vsyncadd %s732, %s758
          %s760 = sadd.s32 %s34, %s756
          %s761 = smul.addr %s760, 128
          %s762 = scalar_lea.hbm %s5, %s761
          %s763 = sshll.u32 %s735, 4
          %s764 = int_to_ptr.vmem [resolvable:$true] %s763
          %769 = dma.vmem_to_hbm [thread:$0]  %s764, 256, %s762, %s732, 128, 128, 8
        $region52: #{tpu_custom_call.1} parent=35 // pred_fallthru
          _
      $region36: #{tpu_custom_call.1} parent=5 // pred_fallthru
        _
      %p770 = scmp.le.s32.totalorder 2, %s24
      // Predicated region
      $region53: #{tpu_custom_call.1} parent=5 // pred_check
        %p771 = pneg %p770
      $region54: #{tpu_custom_call.1} parent=5 // pred_check_branch
        %773 = sbr.rel (%p771) target = $region56
      $region55: #{tpu_custom_call.1} parent=5 // pred_region
        %s774 = ssub.s32 %s24, 2
        // Predicated region
        $region57: #{tpu_custom_call.1} parent=55 // pred_check
          %p775 = pneg %p175
        $region58: #{tpu_custom_call.1} parent=55 // pred_check_branch
          %777 = sbr.rel (%p775) target = $region60
        $region59: #{tpu_custom_call.1} parent=55 // pred_region
          %s778 = sand.u32 %s160, 1
          %s779 = scalar_lea.sflag [#allocation4], %s778
          %s780 = sand.u32 %s160, 1
          %s781 = smul.addr %s780, 16
          %s782 = scalar_lea.vmem [#allocation7], %s781
          %783 = dma.done %s779, 256
        $region60: #{tpu_custom_call.1} parent=55 // pred_fallthru
          _
        // Predicated region
        $region61: #{tpu_custom_call.1} parent=55 // pred_check
          %p784 = pneg %p203
        $region62: #{tpu_custom_call.1} parent=55 // pred_check_branch
          %786 = sbr.rel (%p784) target = $region64
        $region63: #{tpu_custom_call.1} parent=55 // pred_region
          %s787 = sand.u32 %s188, 1
          %s788 = scalar_lea.sflag [#allocation9], %s787
          %s789 = sand.u32 %s188, 1
          %s790 = smul.addr %s789, 16
          %s791 = scalar_lea.vmem [#allocation8], %s790
          %792 = dma.done %s788, 256
        $region64: #{tpu_custom_call.1} parent=55 // pred_fallthru
          _
      $region56: #{tpu_custom_call.1} parent=5 // pred_fallthru
        _
    $region6: #{tpu_custom_call.1} parent=1 // loop_footer
      %s28 = sadd.s32 1, %s24
    $region7: #{tpu_custom_call.1} parent=1 // loop_footer_branch
      %23 = sbr.rel target = $region3
    $region8: #{tpu_custom_call.1} parent=1 // loop_exit
      _
    %793 = vsyncpa [#allocation3], 1
    %s794 = scalar_lea.sflag [#allocation3], 1
    %795 = vsyncpa %s794, 1
    %796 = vsyncpa [#allocation6], 1
    %s797 = scalar_lea.sflag [#allocation6], 1
    %798 = vsyncpa %s797, 1
    %799 = vsyncpa [#allocation4], 1
    %s800 = scalar_lea.sflag [#allocation4], 1
    %801 = vsyncpa %s800, 1
    %802 = vsyncpa [#allocation9], 1
    %s803 = scalar_lea.sflag [#allocation9], 1
    %804 = vsyncpa %s803, 1

// kernel: tpu_custom_call.1
$region0: #{tpu_custom_call.1}
  #allocation0 [shape = 'u32[]', space=smem, size = 0x4, offset = 0x4, fixed_abs, tag = 'smem constant byte address 0x4 - core index']
  #allocation1 [shape = 'u32[144,128]{1,0:T(1,128)}', space=vmem, size = 0x12000, scoped, tag = 'internal scratch']
  %s0 = inlined_call_operand.hbm [shape: f32[8,8,32], index: 0, kind: input, shape index: {}]
  %s1 = inlined_call_operand.hbm [shape: f32[8,8,32], index: 1, kind: input, shape index: {}]
  %s2 = inlined_call_operand.hbm [shape: f32[8,8,32], index: 2, kind: input, shape index: {}]
  %s3 = inlined_call_operand.hbm [shape: s8[8,8,8], index: 3, kind: input, shape index: {}]
  %s4 = inlined_call_operand.hbm [shape: f32[8,8,32], index: 4, kind: output, shape index: {0}]
  %s5 = inlined_call_operand.hbm [shape: f32[8,8,8], index: 5, kind: output, shape index: {1}]
  %6 = xla_tuple %s4, %s5
  %s7 = sld [smem:[#allocation0]]
  $region73: #{tpu_custom_call.1} parent=0
    _
  %s9 = ssub.s32 1, %s7
  %s10 = scalar_select 0, %s9, %s7
  $region1: #{tpu_custom_call.1} parent=0
    #allocation2 [shape = 'u8[16384]{0}', space=vmem, size = 0x4000, scoped, tag = 'input window, operand 0']
    #allocation3 [shape = 's32[2]{0}', space=sflag, size = 0x8, scoped, tag = 'scoped memory for tpu_custom_call.1']
    #allocation4 [shape = 's32[2]{0}', space=sflag, size = 0x8, scoped, tag = 'scoped memory for tpu_custom_call.1']
    #allocation5 [shape = 'u8[16384]{0}', space=vmem, size = 0x4000, scoped, tag = 'input window, operand 1']
    #allocation6 [shape = 's32[2]{0}', space=sflag, size = 0x8, scoped, tag = 'scoped memory for tpu_custom_call.1']
    #allocation7 [shape = 'u8[16384]{0}', space=vmem, size = 0x4000, scoped, tag = 'input window, operand 2']
    #allocation8 [shape = 'u8[4096]{0}', space=vmem, size = 0x1000, scoped, tag = 'input window, operand 3']
    #allocation9 [shape = 's32[2]{0}', space=sflag, size = 0x8, scoped, tag = 'scoped memory for tpu_custom_call.1']
    #allocation10 [shape = 'u8[16384]{0}', space=vmem, size = 0x4000, scoped, tag = 'output window, operand 0']
    #allocation11 [shape = 'u8[16384]{0}', space=vmem, size = 0x4000, scoped, tag = 'output window, operand 1']
    #allocation12 [shape = 's32[2]{0}', space=sflag, size = 0x8, scoped, tag = 'scoped memory for tpu_custom_call.1']
    %11 = vsyncpa [#allocation3], 0
    %s12 = scalar_lea.sflag [#allocation3], 1
    %13 = vsyncpa %s12, 0
    %14 = vsyncpa [#allocation6], 0
    %s15 = scalar_lea.sflag [#allocation6], 1
    %16 = vsyncpa %s15, 0
    %17 = vsyncpa [#allocation9], 0
    %s18 = scalar_lea.sflag [#allocation9], 1
    %19 = vsyncpa %s18, 0
    %20 = vsyncpa [#allocation4], 0
    %s21 = scalar_lea.sflag [#allocation4], 1
    %22 = vsyncpa %s21, 0
    %23 = vsyncpa [#allocation12], 0
    %s24 = scalar_lea.sflag [#allocation12], 1
    %25 = vsyncpa %s24, 0
    loop: start=0, step=1, limit=6
    $region2: #{tpu_custom_call.1} parent=1 // loop_pre_header
      _
    $region3: #{tpu_custom_call.1} parent=1 // loop_header
      %s27 = sphi 0, %s31
      %p28 = scmp.ge.s32.totalorder %s27, 6
      %s34 = sphi 0, %s46
      %s35 = sphi 0, %s42
      %s36 = sphi 0, %s34
      %s37 = sphi 0, %s35
      %s38 = sphi 0, %s36
      %s39 = sphi 0, %s37
      %s51 = sphi 0, %s53
      %s54 = sphi 0, %s51
      %s55 = sphi 0, %s54
      %s71 = sphi 0, %s55
      %s77 = sphi 0, %s79
      %s80 = sphi 0, %s77
      %s81 = sphi 0, %s80
      %s97 = sphi 0, %s81
      %s103 = sphi 0, %s105
      %s106 = sphi 0, %s103
      %s107 = sphi 0, %s106
      %s123 = sphi 0, %s107
      %s131 = sphi 0, %s133
      %s134 = sphi 0, %s131
      %s135 = sphi 0, %s134
      %s151 = sphi 0, %s135
      %s159 = sphi 0, %s161
      %s162 = sphi 0, %s159
      %s163 = sphi 0, %s162
      %s179 = sphi 0, %s163
      %s187 = sphi 0, %s189
      %s190 = sphi 0, %s187
      %s191 = sphi 0, %s190
      %s207 = sphi 0, %s191
    $region4: #{tpu_custom_call.1} parent=1 // loop_header_branch
      %30 = sbr.rel (%p28) target = $region8
    $region5: #{tpu_custom_call.1} parent=1 // loop_body
      %s32 = ssub.s32 %s27, 1
      %s33 = ssub.s32 %s27, 2
      %s40 = sadd.s32 1, %s35
      %p41 = scmp.ge.s32.totalorder %s40, 1
      %s42 = scalar_select %p41, 0, %s40
      %s43 = sadd.s32 1, %s34
      %s44 = scalar_select %p41, %s43, %s34
      %p45 = scmp.ge.s32.totalorder %s44, 4
      %s46 = scalar_select %p45, 0, %s44
      %s47 = ssub.s32 %s34, %s46
      %s48 = ssub.s32 %s35, %s42
      %s49 = sor.u32 %s47, %s48
      %p50 = scmp.eq.s32.totalorder %s49, 0
      %s52 = sadd.s32 %s51, 1
      %s53 = scalar_select %p50, %s51, %s52
      %p56 = pneg %p50
      %p57 = scmp.eq.s32.totalorder %s27, 3
      %p58 = por %p56, %p57
      %p59 = scmp.ne.s32.totalorder %s51, %s54
      %p60 = scmp.eq.s32.totalorder %s27, 0
      %p61 = por %p59, %p60
      %p62 = scmp.ne.s32.totalorder %s51, %s54
      %p63 = scmp.eq.s32.totalorder %s32, 3
      %p64 = por %p62, %p63
      %p65 = scmp.ne.s32.totalorder %s54, %s55
      %p66 = scmp.eq.s32.totalorder %s32, 0
      %p67 = por %p65, %p66
      %p68 = scmp.ne.s32.totalorder %s54, %s55
      %p69 = scmp.eq.s32.totalorder %s33, 3
      %p70 = por %p68, %p69
      %p72 = scmp.ne.s32.totalorder %s55, %s71
      %p73 = scmp.eq.s32.totalorder %s33, 0
      %p74 = por %p72, %p73
      %s75 = ssub.s32 %s34, %s46
      %p76 = scmp.eq.s32.totalorder %s75, 0
      %s78 = sadd.s32 %s77, 1
      %s79 = scalar_select %p76, %s77, %s78
      %p82 = pneg %p76
      %p83 = scmp.eq.s32.totalorder %s27, 3
      %p84 = por %p82, %p83
      %p85 = scmp.ne.s32.totalorder %s77, %s80
      %p86 = scmp.eq.s32.totalorder %s27, 0
      %p87 = por %p85, %p86
      %p88 = scmp.ne.s32.totalorder %s77, %s80
      %p89 = scmp.eq.s32.totalorder %s32, 3
      %p90 = por %p88, %p89
      %p91 = scmp.ne.s32.totalorder %s80, %s81
      %p92 = scmp.eq.s32.totalorder %s32, 0
      %p93 = por %p91, %p92
      %p94 = scmp.ne.s32.totalorder %s80, %s81
      %p95 = scmp.eq.s32.totalorder %s33, 3
      %p96 = por %p94, %p95
      %p98 = scmp.ne.s32.totalorder %s81, %s97
      %p99 = scmp.eq.s32.totalorder %s33, 0
      %p100 = por %p98, %p99
      %s101 = ssub.s32 %s34, %s46
      %p102 = scmp.eq.s32.totalorder %s101, 0
      %s104 = sadd.s32 %s103, 1
      %s105 = scalar_select %p102, %s103, %s104
      %p108 = pneg %p102
      %p109 = scmp.eq.s32.totalorder %s27, 3
      %p110 = por %p108, %p109
      %p111 = scmp.ne.s32.totalorder %s103, %s106
      %p112 = scmp.eq.s32.totalorder %s27, 0
      %p113 = por %p111, %p112
      %p114 = scmp.ne.s32.totalorder %s103, %s106
      %p115 = scmp.eq.s32.totalorder %s32, 3
      %p116 = por %p114, %p115
      %p117 = scmp.ne.s32.totalorder %s106, %s107
      %p118 = scmp.eq.s32.totalorder %s32, 0
      %p119 = por %p117, %p118
      %p120 = scmp.ne.s32.totalorder %s106, %s107
      %p121 = scmp.eq.s32.totalorder %s33, 3
      %p122 = por %p120, %p121
      %p124 = scmp.ne.s32.totalorder %s107, %s123
      %p125 = scmp.eq.s32.totalorder %s33, 0
      %p126 = por %p124, %p125
      %s127 = ssub.s32 %s34, %s46
      %s128 = ssub.s32 %s35, %s42
      %s129 = sor.u32 %s127, %s128
      %p130 = scmp.eq.s32.totalorder %s129, 0
      %s132 = sadd.s32 %s131, 1
      %s133 = scalar_select %p130, %s131, %s132
      %p136 = pneg %p130
      %p137 = scmp.eq.s32.totalorder %s27, 3
      %p138 = por %p136, %p137
      %p139 = scmp.ne.s32.totalorder %s131, %s134
      %p140 = scmp.eq.s32.totalorder %s27, 0
      %p141 = por %p139, %p140
      %p142 = scmp.ne.s32.totalorder %s131, %s134
      %p143 = scmp.eq.s32.totalorder %s32, 3
      %p144 = por %p142, %p143
      %p145 = scmp.ne.s32.totalorder %s134, %s135
      %p146 = scmp.eq.s32.totalorder %s32, 0
      %p147 = por %p145, %p146
      %p148 = scmp.ne.s32.totalorder %s134, %s135
      %p149 = scmp.eq.s32.totalorder %s33, 3
      %p150 = por %p148, %p149
      %p152 = scmp.ne.s32.totalorder %s135, %s151
      %p153 = scmp.eq.s32.totalorder %s33, 0
      %p154 = por %p152, %p153
      %s155 = ssub.s32 %s34, %s46
      %s156 = ssub.s32 %s35, %s42
      %s157 = sor.u32 %s155, %s156
      %p158 = scmp.eq.s32.totalorder %s157, 0
      %s160 = sadd.s32 %s159, 1
      %s161 = scalar_select %p158, %s159, %s160
      %p164 = pneg %p158
      %p165 = scmp.eq.s32.totalorder %s27, 3
      %p166 = por %p164, %p165
      %p167 = scmp.ne.s32.totalorder %s159, %s162
      %p168 = scmp.eq.s32.totalorder %s27, 0
      %p169 = por %p167, %p168
      %p170 = scmp.ne.s32.totalorder %s159, %s162
      %p171 = scmp.eq.s32.totalorder %s32, 3
      %p172 = por %p170, %p171
      %p173 = scmp.ne.s32.totalorder %s162, %s163
      %p174 = scmp.eq.s32.totalorder %s32, 0
      %p175 = por %p173, %p174
      %p176 = scmp.ne.s32.totalorder %s162, %s163
      %p177 = scmp.eq.s32.totalorder %s33, 3
      %p178 = por %p176, %p177
      %p180 = scmp.ne.s32.totalorder %s163, %s179
      %p181 = scmp.eq.s32.totalorder %s33, 0
      %p182 = por %p180, %p181
      %s183 = ssub.s32 %s34, %s46
      %s184 = ssub.s32 %s35, %s42
      %s185 = sor.u32 %s183, %s184
      %p186 = scmp.eq.s32.totalorder %s185, 0
      %s188 = sadd.s32 %s187, 1
      %s189 = scalar_select %p186, %s187, %s188
      %p192 = pneg %p186
      %p193 = scmp.eq.s32.totalorder %s27, 3
      %p194 = por %p192, %p193
      %p195 = scmp.ne.s32.totalorder %s187, %s190
      %p196 = scmp.eq.s32.totalorder %s27, 0
      %p197 = por %p195, %p196
      %p198 = scmp.ne.s32.totalorder %s187, %s190
      %p199 = scmp.eq.s32.totalorder %s32, 3
      %p200 = por %p198, %p199
      %p201 = scmp.ne.s32.totalorder %s190, %s191
      %p202 = scmp.eq.s32.totalorder %s32, 0
      %p203 = por %p201, %p202
      %p204 = scmp.ne.s32.totalorder %s190, %s191
      %p205 = scmp.eq.s32.totalorder %s33, 3
      %p206 = por %p204, %p205
      %p208 = scmp.ne.s32.totalorder %s191, %s207
      %p209 = scmp.eq.s32.totalorder %s33, 0
      %p210 = por %p208, %p209
      %p211 = scmp.le.s32.totalorder 1, %s27
      %p212 = scmp.lt.s32.totalorder %s27, 5
      %p213 = pnand %p211, %p212
      %p214 = pneg %p213
      // Predicated region
      $region9: #{tpu_custom_call.1} parent=5 // pred_check
        _
      $region10: #{tpu_custom_call.1} parent=5 // pred_check_branch
        %216 = sbr.rel (%p213) target = $region12
      $region11: #{tpu_custom_call.1} parent=5 // pred_region
        %s217 = ssub.s32 %s27, 1
      $region12: #{tpu_custom_call.1} parent=5 // pred_fallthru
        _
      %p218 = scmp.lt.s32.totalorder %s27, 4
      // Predicated region
      $region13: #{tpu_custom_call.1} parent=5 // pred_check
        %p219 = pneg %p218
      $region14: #{tpu_custom_call.1} parent=5 // pred_check_branch
        %221 = sbr.rel (%p219) target = $region16
      $region15: #{tpu_custom_call.1} parent=5 // pred_region
        // Predicated region
        $region17: #{tpu_custom_call.1} parent=15 // pred_check
          %p222 = pneg %p61
        $region18: #{tpu_custom_call.1} parent=15 // pred_check_branch
          %224 = sbr.rel (%p222) target = $region20
        $region19: #{tpu_custom_call.1} parent=15 // pred_region
          %s225 = sand.u32 %s51, 1
          %s226 = scalar_lea.sflag [#allocation3], %s225
          %s227 = sand.u32 %s51, 1
          %s228 = smul.addr %s227, 16
          %s229 = scalar_lea.vmem [#allocation2], %s228
          %s230 = smul.u32 2, %s34
          %s232 = ssub.s32 256, 256
          %233 = vsyncadd %s226, %s232
          %s234 = sadd.s32 %s35, %s230
          %s235 = smul.addr %s234, 128
          %s236 = scalar_lea.hbm %s0, %s235
          %s237 = sshll.u32 %s229, 4
          %s238 = int_to_ptr.vmem [resolvable:$true] %s237
          %243 = dma.hbm_to_vmem [thread:$0]  %s236, 256, %s238, %s226, 128, 128, 8
        $region20: #{tpu_custom_call.1} parent=15 // pred_fallthru
          _
        // Predicated region
        $region21: #{tpu_custom_call.1} parent=15 // pred_check
          %p244 = pneg %p87
        $region22: #{tpu_custom_call.1} parent=15 // pred_check_branch
          %246 = sbr.rel (%p244) target = $region24
        $region23: #{tpu_custom_call.1} parent=15 // pred_region
          %s247 = sand.u32 %s27, 1
          %s248 = scalar_lea.sflag [#allocation6], %s247
          %s249 = sand.u32 %s77, 1
          %s250 = smul.addr %s249, 16
          %s251 = scalar_lea.vmem [#allocation5], %s250
          %s252 = smul.u32 2, %s34
          %s254 = ssub.s32 256, 256
          %255 = vsyncadd %s248, %s254
          %s256 = smul.addr %s252, 128
          %s257 = scalar_lea.hbm %s1, %s256
          %s258 = sshll.u32 %s251, 4
          %s259 = int_to_ptr.vmem [resolvable:$true] %s258
          %264 = dma.hbm_to_vmem [thread:$0]  %s257, 256, %s259, %s248, 128, 128, 8
        $region24: #{tpu_custom_call.1} parent=15 // pred_fallthru
          _
        // Predicated region
        $region25: #{tpu_custom_call.1} parent=15 // pred_check
          %p265 = pneg %p113
        $region26: #{tpu_custom_call.1} parent=15 // pred_check_branch
          %267 = sbr.rel (%p265) target = $region28
        $region27: #{tpu_custom_call.1} parent=15 // pred_region
          %s268 = sand.u32 %s27, 1
          %s269 = scalar_lea.sflag [#allocation6], %s268
          %s270 = sand.u32 %s103, 1
          %s271 = smul.addr %s270, 16
          %s272 = scalar_lea.vmem [#allocation7], %s271
          %s273 = smul.u32 2, %s34
          %s275 = ssub.s32 256, 256
          %276 = vsyncadd %s269, %s275
          %s277 = smul.addr %s273, 128
          %s278 = scalar_lea.hbm %s2, %s277
          %s279 = sshll.u32 %s272, 4
          %s280 = int_to_ptr.vmem [resolvable:$true] %s279
          %285 = dma.hbm_to_vmem [thread:$0]  %s278, 256, %s280, %s269, 128, 128, 8
        $region28: #{tpu_custom_call.1} parent=15 // pred_fallthru
          _
        // Predicated region
        $region29: #{tpu_custom_call.1} parent=15 // pred_check
          %p286 = pneg %p141
        $region30: #{tpu_custom_call.1} parent=15 // pred_check_branch
          %288 = sbr.rel (%p286) target = $region32
        $region31: #{tpu_custom_call.1} parent=15 // pred_region
          %s289 = sand.u32 %s131, 1
          %s290 = scalar_lea.sflag [#allocation9], %s289
          %s291 = sand.u32 %s131, 1
          %s292 = smul.addr %s291, 4
          %s293 = scalar_lea.vmem [#allocation8], %s292
          %s294 = smul.u32 2, %s34
          %s296 = ssub.s32 64, 64
          %297 = vsyncadd %s290, %s296
          %s298 = sadd.s32 %s35, %s294
          %s299 = smul.addr %s298, 32
          %s300 = scalar_lea.hbm %s3, %s299
          %s301 = sshll.u32 %s293, 4
          %s302 = int_to_ptr.vmem [resolvable:$true] %s301
          %307 = dma.hbm_to_vmem [thread:$0]  %s300, 64, %s302, %s290, 32, 32, 2
        $region32: #{tpu_custom_call.1} parent=15 // pred_fallthru
          _
      $region16: #{tpu_custom_call.1} parent=5 // pred_fallthru
        _
      %p308 = scmp.le.s32.totalorder 1, %s27
      %p309 = scmp.lt.s32.totalorder %s27, 5
      %p310 = pnand %p308, %p309
      %p311 = pneg %p310
      // Predicated region
      $region33: #{tpu_custom_call.1} parent=5 // pred_check
        _
      $region34: #{tpu_custom_call.1} parent=5 // pred_check_branch
        %313 = sbr.rel (%p310) target = $region36
      $region35: #{tpu_custom_call.1} parent=5 // pred_region
        %s314 = ssub.s32 %s27, 1
        %s315 = sand.u32 %s54, 1
        %s316 = scalar_lea.sflag [#allocation3], %s315
        %s317 = sand.u32 %s54, 1
        %s318 = smul.addr %s317, 16
        %s319 = scalar_lea.vmem [#allocation2], %s318
        // Predicated region
        $region37: #{tpu_custom_call.1} parent=35 // pred_check
          %p320 = pneg %p67
        $region38: #{tpu_custom_call.1} parent=35 // pred_check_branch
          %322 = sbr.rel (%p320) target = $region40
        $region39: #{tpu_custom_call.1} parent=35 // pred_region
          %323 = dma.done %s316, 256
        $region40: #{tpu_custom_call.1} parent=35 // pred_fallthru
          _
        %s324 = sand.u32 %s32, 1
        %s325 = scalar_lea.sflag [#allocation6], %s324
        %s326 = sand.u32 %s80, 1
        %s327 = smul.addr %s326, 16
        %s328 = scalar_lea.vmem [#allocation5], %s327
        // Predicated region
        $region41: #{tpu_custom_call.1} parent=35 // pred_check
          %p329 = pneg %p93
        $region42: #{tpu_custom_call.1} parent=35 // pred_check_branch
          %331 = sbr.rel (%p329) target = $region44
        $region43: #{tpu_custom_call.1} parent=35 // pred_region
          %332 = dma.done %s325, 256
        $region44: #{tpu_custom_call.1} parent=35 // pred_fallthru
          _
        %s333 = sand.u32 %s32, 1
        %s334 = scalar_lea.sflag [#allocation6], %s333
        %s335 = sand.u32 %s106, 1
        %s336 = smul.addr %s335, 16
        %s337 = scalar_lea.vmem [#allocation7], %s336
        // Predicated region
        $region45: #{tpu_custom_call.1} parent=35 // pred_check
          %p338 = pneg %p119
        $region46: #{tpu_custom_call.1} parent=35 // pred_check_branch
          %340 = sbr.rel (%p338) target = $region48
        $region47: #{tpu_custom_call.1} parent=35 // pred_region
          %341 = dma.done %s334, 256
        $region48: #{tpu_custom_call.1} parent=35 // pred_fallthru
          _
        %s342 = sand.u32 %s134, 1
        %s343 = scalar_lea.sflag [#allocation9], %s342
        %s344 = sand.u32 %s134, 1
        %s345 = smul.addr %s344, 4
        %s346 = scalar_lea.vmem [#allocation8], %s345
        // Predicated region
        $region49: #{tpu_custom_call.1} parent=35 // pred_check
          %p347 = pneg %p147
        $region50: #{tpu_custom_call.1} parent=35 // pred_check_branch
          %349 = sbr.rel (%p347) target = $region52
        $region51: #{tpu_custom_call.1} parent=35 // pred_region
          %350 = dma.done %s343, 64
        $region52: #{tpu_custom_call.1} parent=35 // pred_fallthru
          _
        %s351 = sand.u32 %s54, 1
        %s352 = scalar_lea.sflag [#allocation3], %s351
        %s353 = sand.u32 %s54, 1
        %s354 = smul.addr %s353, 16
        %s355 = scalar_lea.vmem [#allocation2], %s354
        %p356 = pneg %p67
        %p357 = pneg %p64
        %s358 = sand.u32 %s32, 1
        %s359 = scalar_lea.sflag [#allocation6], %s358
        %s360 = sand.u32 %s80, 1
        %s361 = smul.addr %s360, 16
        %s362 = scalar_lea.vmem [#allocation5], %s361
        %p363 = pneg %p93
        %p364 = pneg %p90
        %s365 = sand.u32 %s32, 1
        %s366 = scalar_lea.sflag [#allocation6], %s365
        %s367 = sand.u32 %s106, 1
        %s368 = smul.addr %s367, 16
        %s369 = scalar_lea.vmem [#allocation7], %s368
        %p370 = pneg %p119
        %p371 = pneg %p116
        %s372 = sand.u32 %s134, 1
        %s373 = scalar_lea.sflag [#allocation9], %s372
        %s374 = sand.u32 %s134, 1
        %s375 = smul.addr %s374, 4
        %s376 = scalar_lea.vmem [#allocation8], %s375
        %p377 = pneg %p147
        %p378 = pneg %p144
        %p379 = pneg %p175
        %p380 = pneg %p172
        %s381 = sand.u32 %s162, 1
        %s382 = scalar_lea.sflag [#allocation4], %s381
        %s383 = sand.u32 %s162, 1
        %s384 = smul.addr %s383, 16
        %s385 = scalar_lea.vmem [#allocation10], %s384
        %p386 = pneg %p203
        %p387 = pneg %p200
        %s388 = sand.u32 %s190, 1
        %s389 = scalar_lea.sflag [#allocation12], %s388
        %s390 = sand.u32 %s190, 1
        %s391 = smul.addr %s390, 16
        %s392 = scalar_lea.vmem [#allocation11], %s391
        %s393 = smul.u32 2, %s36
        %s394 = smul.u32 2, %s36
        %s395 = smul.u32 2, %s36
        %s396 = smul.u32 2, %s36
        %s397 = smul.u32 2, %s36
        %s398 = smul.u32 2, %s36
        %v401 = vld [vmem:[%s319] sm:$0xff]
        %v402 = vld [vmem:[%s319 + $0x8] sm:$0xff]
        %v403 = vmul.f32 %v401, 0.17677669
        %v404 = vmul.f32 %v402, 0.17677669
        %v405 = vld [vmem:[%s328] sm:$0xff]
        %v406 = vld [vmem:[%s328 + $0x8] sm:$0xff]
        %v407 = vld [vmem:[%s337] sm:$0xff]
        %v408 = vld [vmem:[%s337 + $0x8] sm:$0xff]
        %v409 = vld [vmem:[%s346] sm:$0x3]
        %v410 = vld [vmem:[%s346 + $0x2] sm:$0x3]
        %vm411 = vnez %v409
        %vm412 = vnez %v410
        %vm413 = vcmask 261120
        %v415 = vsel %vm413, %v403, 0
        %v418 = vsel %vm413, %v405, 0
        %420 = vmatprep.subr.mxu0 0.0
        %421 = vmatpush1.xpose.msra.mxu0 %v418
        %422 = vmatprep.subr.mxu0 0.0
        %423 = vmatpush1.xpose.msra.mxu0 0.0
        %424 = vmatprep.subr.mxu0 0.0
        %425 = vmatpush1.xpose.msra.mxu0 0.0
        %426 = vmatprep.subr.mxu0 0.0
        %427 = vmatpush1.xpose.msra.mxu0 0.0
        %428 = vmatprep.subr.mxu0 0.0
        %429 = vmatpush1.xpose.msra.mxu0 0.0
        %430 = vmatprep.subr.mxu0 0.0
        %431 = vmatpush1.xpose.msra.mxu0 0.0
        %432 = vmatprep.subr.mxu0 0.0
        %433 = vmatpush1.xpose.msra.mxu0 0.0
        %434 = vmatprep.subr.mxu0 0.0
        %435 = vmatpush1.xpose.msra.mxu0 0.0
        %436 = vmatprep.subr.mxu0 0.0
        %437 = vmatpush1.xpose.msra.mxu0 0.0
        %438 = vmatprep.subr.mxu0 0.0
        %439 = vmatpush1.xpose.msra.mxu0 0.0
        %440 = vmatprep.subr.mxu0 0.0
        %441 = vmatpush1.xpose.msra.mxu0 0.0
        %442 = vmatprep.subr.mxu0 0.0
        %443 = vmatpush1.xpose.msra.mxu0 0.0
        %444 = vmatprep.subr.mxu0 0.0
        %445 = vmatpush1.xpose.msra.mxu0 0.0
        %446 = vmatprep.subr.mxu0 0.0
        %447 = vmatpush1.xpose.msra.mxu0 0.0
        %448 = vmatprep.subr.mxu0 0.0
        %449 = vmatpush1.xpose.msra.mxu0 0.0
        %450 = vmatprep.subr.mxu0 0.0
        %451 = vmatpush1.xpose.msra.mxu0 0.0
        %452 = vmatprep.subr.mxu0 0.0
        %453 = vmatpush1.xpose.msra.mxu0 0.0
        %454 = vmatprep.subr.mxu0 0.0
        %455 = vmatpush1.xpose.msra.mxu0 0.0
        %456 = vmatprep.subr.mxu0 0.0
        %457 = vmatpush1.xpose.msra.mxu0 0.0
        %458 = vmatprep.subr.mxu0 0.0
        %459 = vmatpush1.xpose.msra.mxu0 0.0
        %460 = vmatprep.subr.mxu0 0.0
        %461 = vmatpush1.xpose.msra.mxu0 0.0
        %462 = vmatprep.subr.mxu0 0.0
        %463 = vmatpush1.xpose.msra.mxu0 0.0
        %464 = vmatprep.subr.mxu0 0.0
        %465 = vmatpush1.xpose.msra.mxu0 0.0
        %466 = vmatprep.subr.mxu0 0.0
        %467 = vmatpush1.xpose.msra.mxu0 0.0
        %468 = vmatprep.subr.mxu0 0.0
        %469 = vmatpush1.xpose.msra.mxu0 0.0
        %470 = vmatprep.subr.mxu0 0.0
        %471 = vmatpush1.xpose.msra.mxu0 0.0
        %472 = vmatprep.subr.mxu0 0.0
        %473 = vmatpush1.xpose.msra.mxu0 0.0
        %474 = vmatprep.subr.mxu0 0.0
        %475 = vmatpush1.xpose.msra.mxu0 0.0
        %476 = vmatprep.subr.mxu0 0.0
        %477 = vmatpush1.xpose.msra.mxu0 0.0
        %478 = vmatprep.subr.mxu0 0.0
        %479 = vmatpush1.xpose.msra.mxu0 0.0
        %480 = vmatprep.subr.mxu0 0.0
        %481 = vmatpush1.xpose.msra.mxu0 0.0
        %482 = vmatprep.subr.mxu0 0.0
        %483 = vmatpush1.xpose.msra.mxu0 0.0
        %484 = vmatprep.mubr.f32.mxu0 0.0
        %485 = vmatmul.mubr.f32.gmra.mrb[0].mxu0 %v415
        %v486 = vpop.f32.mrb[0].mxu0
        %v487 = vadd.f32 0.0, %v486
        %v488 = vpop.f32.mrb[0].mxu0
        %489 = vdwg.mxu0
        %v491 = vsel %vm413, %v404, 0
        %v494 = vsel %vm413, %v406, 0
        %496 = vmatprep.subr.mxu0 0.0
        %497 = vmatpush1.xpose.msra.mxu0 %v494
        %498 = vmatprep.subr.mxu0 0.0
        %499 = vmatpush1.xpose.msra.mxu0 0.0
        %500 = vmatprep.subr.mxu0 0.0
        %501 = vmatpush1.xpose.msra.mxu0 0.0
        %502 = vmatprep.subr.mxu0 0.0
        %503 = vmatpush1.xpose.msra.mxu0 0.0
        %504 = vmatprep.subr.mxu0 0.0
        %505 = vmatpush1.xpose.msra.mxu0 0.0
        %506 = vmatprep.subr.mxu0 0.0
        %507 = vmatpush1.xpose.msra.mxu0 0.0
        %508 = vmatprep.subr.mxu0 0.0
        %509 = vmatpush1.xpose.msra.mxu0 0.0
        %510 = vmatprep.subr.mxu0 0.0
        %511 = vmatpush1.xpose.msra.mxu0 0.0
        %512 = vmatprep.subr.mxu0 0.0
        %513 = vmatpush1.xpose.msra.mxu0 0.0
        %514 = vmatprep.subr.mxu0 0.0
        %515 = vmatpush1.xpose.msra.mxu0 0.0
        %516 = vmatprep.subr.mxu0 0.0
        %517 = vmatpush1.xpose.msra.mxu0 0.0
        %518 = vmatprep.subr.mxu0 0.0
        %519 = vmatpush1.xpose.msra.mxu0 0.0
        %520 = vmatprep.subr.mxu0 0.0
        %521 = vmatpush1.xpose.msra.mxu0 0.0
        %522 = vmatprep.subr.mxu0 0.0
        %523 = vmatpush1.xpose.msra.mxu0 0.0
        %524 = vmatprep.subr.mxu0 0.0
        %525 = vmatpush1.xpose.msra.mxu0 0.0
        %526 = vmatprep.subr.mxu0 0.0
        %527 = vmatpush1.xpose.msra.mxu0 0.0
        %528 = vmatprep.subr.mxu0 0.0
        %529 = vmatpush1.xpose.msra.mxu0 0.0
        %530 = vmatprep.subr.mxu0 0.0
        %531 = vmatpush1.xpose.msra.mxu0 0.0
        %532 = vmatprep.subr.mxu0 0.0
        %533 = vmatpush1.xpose.msra.mxu0 0.0
        %534 = vmatprep.subr.mxu0 0.0
        %535 = vmatpush1.xpose.msra.mxu0 0.0
        %536 = vmatprep.subr.mxu0 0.0
        %537 = vmatpush1.xpose.msra.mxu0 0.0
        %538 = vmatprep.subr.mxu0 0.0
        %539 = vmatpush1.xpose.msra.mxu0 0.0
        %540 = vmatprep.subr.mxu0 0.0
        %541 = vmatpush1.xpose.msra.mxu0 0.0
        %542 = vmatprep.subr.mxu0 0.0
        %543 = vmatpush1.xpose.msra.mxu0 0.0
        %544 = vmatprep.subr.mxu0 0.0
        %545 = vmatpush1.xpose.msra.mxu0 0.0
        %546 = vmatprep.subr.mxu0 0.0
        %547 = vmatpush1.xpose.msra.mxu0 0.0
        %548 = vmatprep.subr.mxu0 0.0
        %549 = vmatpush1.xpose.msra.mxu0 0.0
        %550 = vmatprep.subr.mxu0 0.0
        %551 = vmatpush1.xpose.msra.mxu0 0.0
        %552 = vmatprep.subr.mxu0 0.0
        %553 = vmatpush1.xpose.msra.mxu0 0.0
        %554 = vmatprep.subr.mxu0 0.0
        %555 = vmatpush1.xpose.msra.mxu0 0.0
        %556 = vmatprep.subr.mxu0 0.0
        %557 = vmatpush1.xpose.msra.mxu0 0.0
        %558 = vmatprep.subr.mxu0 0.0
        %559 = vmatpush1.xpose.msra.mxu0 0.0
        %560 = vmatprep.mubr.f32.mxu0 0.0
        %561 = vmatmul.mubr.f32.gmra.mrb[0].mxu0 %v491
        %v562 = vpop.f32.mrb[0].mxu0
        %v563 = vadd.f32 0.0, %v562
        %v564 = vpop.f32.mrb[0].mxu0
        %565 = vdwg.mxu0
        %v566 = vsel %vm411, 16843009, 0
        %v567 = vsel %vm412, 16843009, 0
        %v568 = vunpack.c.0.s8 %v566
        %v569 = vunpack.c.0.s8 %v567
        %vm570 = vcmp.ne.s32.totalorder %v568, 0
        %vm571 = vcmp.ne.s32.totalorder %v569, 0
        %v572 = vsel %vm570, -1e+09, %v487
        %v573 = vsel %vm571, -1e+09, %v563
        %vm574 = vcmask 64512
        %v575 = vsel %vm574, %v572, -inf
        %576 = vmax.xlane.f32.xlu0 %v575
        %v577 = vpop.xlane.xlu0 %576
        %v578 = vsel %vm574, %v573, -inf
        %579 = vmax.xlane.f32.xlu0 %v578
        %v580 = vpop.xlane.xlu0 %579
        %v581 = vsub.f32 %v572, %v577
        %v582 = vsub.f32 %v573, %v580
        %v583 = vmul.f32 %v581, 1.442695
        %v584 = vpow.pop %v583
        %v585 = vmul.f32 %v582, 1.442695
        %v586 = vpow.pop %v585
        %v587 = vsel %vm574, %v584, 0.0
        %588 = vadd.xlane.f32.xlu0 %v587
        %v589 = vpop.xlane.xlu0 %588
        %v590 = vsel %vm574, %v586, 0.0
        %591 = vadd.xlane.f32.xlu0 %v590
        %v592 = vpop.xlane.xlu0 %591
        %v593 = vrcp.pop %v589
        %v594 = vrcp.pop %v592
        %v595 = vmul.f32 %v589, %v593
        %v596 = vmul.f32 %v592, %v594
        %v597 = vsub.f32 2.0, %v595
        %v598 = vsub.f32 2.0, %v596
        %v599 = vmul.f32 %v593, %v597
        %v600 = vmul.f32 %v594, %v598
        %v601 = vmul.f32 %v584, %v599
        %v602 = vmul.f32 %v586, %v600
        %603 = vst.msk [vmem:[%s392] sm:$0xff] %vm574, %v601
        %604 = vst.msk [vmem:[%s392 + $0x8] sm:$0xff] %vm574, %v602
        %v606 = vsel %vm574, %v601, 0
        %608 = vmatprep.subr.mxu0 0.0
        %609 = vmatpush1.msra.mxu0 %v407
        %610 = vmatprep.subr.mxu0 0.0
        %611 = vmatpush1.msra.mxu0 0.0
        %612 = vmatprep.subr.mxu0 0.0
        %613 = vmatpush1.msra.mxu0 0.0
        %614 = vmatprep.subr.mxu0 0.0
        %615 = vmatpush1.msra.mxu0 0.0
        %616 = vmatprep.subr.mxu0 0.0
        %617 = vmatpush1.msra.mxu0 0.0
        %618 = vmatprep.subr.mxu0 0.0
        %619 = vmatpush1.msra.mxu0 0.0
        %620 = vmatprep.subr.mxu0 0.0
        %621 = vmatpush1.msra.mxu0 0.0
        %622 = vmatprep.subr.mxu0 0.0
        %623 = vmatpush1.msra.mxu0 0.0
        %624 = vmatprep.subr.mxu0 0.0
        %625 = vmatpush1.msra.mxu0 0.0
        %626 = vmatprep.subr.mxu0 0.0
        %627 = vmatpush1.msra.mxu0 0.0
        %628 = vmatprep.subr.mxu0 0.0
        %629 = vmatpush1.msra.mxu0 0.0
        %630 = vmatprep.subr.mxu0 0.0
        %631 = vmatpush1.msra.mxu0 0.0
        %632 = vmatprep.subr.mxu0 0.0
        %633 = vmatpush1.msra.mxu0 0.0
        %634 = vmatprep.subr.mxu0 0.0
        %635 = vmatpush1.msra.mxu0 0.0
        %636 = vmatprep.subr.mxu0 0.0
        %637 = vmatpush1.msra.mxu0 0.0
        %638 = vmatprep.subr.mxu0 0.0
        %639 = vmatpush1.msra.mxu0 0.0
        %640 = vmatprep.subr.mxu0 0.0
        %641 = vmatpush1.msra.mxu0 0.0
        %642 = vmatprep.subr.mxu0 0.0
        %643 = vmatpush1.msra.mxu0 0.0
        %644 = vmatprep.subr.mxu0 0.0
        %645 = vmatpush1.msra.mxu0 0.0
        %646 = vmatprep.subr.mxu0 0.0
        %647 = vmatpush1.msra.mxu0 0.0
        %648 = vmatprep.subr.mxu0 0.0
        %649 = vmatpush1.msra.mxu0 0.0
        %650 = vmatprep.subr.mxu0 0.0
        %651 = vmatpush1.msra.mxu0 0.0
        %652 = vmatprep.subr.mxu0 0.0
        %653 = vmatpush1.msra.mxu0 0.0
        %654 = vmatprep.subr.mxu0 0.0
        %655 = vmatpush1.msra.mxu0 0.0
        %656 = vmatprep.subr.mxu0 0.0
        %657 = vmatpush1.msra.mxu0 0.0
        %658 = vmatprep.subr.mxu0 0.0
        %659 = vmatpush1.msra.mxu0 0.0
        %660 = vmatprep.subr.mxu0 0.0
        %661 = vmatpush1.msra.mxu0 0.0
        %662 = vmatprep.subr.mxu0 0.0
        %663 = vmatpush1.msra.mxu0 0.0
        %664 = vmatprep.subr.mxu0 0.0
        %665 = vmatpush1.msra.mxu0 0.0
        %666 = vmatprep.subr.mxu0 0.0
        %667 = vmatpush1.msra.mxu0 0.0
        %668 = vmatprep.subr.mxu0 0.0
        %669 = vmatpush1.msra.mxu0 0.0
        %670 = vmatprep.subr.mxu0 0.0
        %671 = vmatpush1.msra.mxu0 0.0
        %672 = vmatprep.mubr.f32.mxu0 0.0
        %673 = vmatmul.mubr.f32.gmra.mrb[0].mxu0 %v606
        %v674 = vpop.f32.mrb[0].mxu0
        %v675 = vadd.f32 0.0, %v674
        %v676 = vpop.f32.mrb[0].mxu0
        %677 = vdwg.mxu0
        %v679 = vsel %vm574, %v602, 0
        %681 = vmatprep.subr.mxu0 0.0
        %682 = vmatpush1.msra.mxu0 %v408
        %683 = vmatprep.subr.mxu0 0.0
        %684 = vmatpush1.msra.mxu0 0.0
        %685 = vmatprep.subr.mxu0 0.0
        %686 = vmatpush1.msra.mxu0 0.0
        %687 = vmatprep.subr.mxu0 0.0
        %688 = vmatpush1.msra.mxu0 0.0
        %689 = vmatprep.subr.mxu0 0.0
        %690 = vmatpush1.msra.mxu0 0.0
        %691 = vmatprep.subr.mxu0 0.0
        %692 = vmatpush1.msra.mxu0 0.0
        %693 = vmatprep.subr.mxu0 0.0
        %694 = vmatpush1.msra.mxu0 0.0
        %695 = vmatprep.subr.mxu0 0.0
        %696 = vmatpush1.msra.mxu0 0.0
        %697 = vmatprep.subr.mxu0 0.0
        %698 = vmatpush1.msra.mxu0 0.0
        %699 = vmatprep.subr.mxu0 0.0
        %700 = vmatpush1.msra.mxu0 0.0
        %701 = vmatprep.subr.mxu0 0.0
        %702 = vmatpush1.msra.mxu0 0.0
        %703 = vmatprep.subr.mxu0 0.0
        %704 = vmatpush1.msra.mxu0 0.0
        %705 = vmatprep.subr.mxu0 0.0
        %706 = vmatpush1.msra.mxu0 0.0
        %707 = vmatprep.subr.mxu0 0.0
        %708 = vmatpush1.msra.mxu0 0.0
        %709 = vmatprep.subr.mxu0 0.0
        %710 = vmatpush1.msra.mxu0 0.0
        %711 = vmatprep.subr.mxu0 0.0
        %712 = vmatpush1.msra.mxu0 0.0
        %713 = vmatprep.subr.mxu0 0.0
        %714 = vmatpush1.msra.mxu0 0.0
        %715 = vmatprep.subr.mxu0 0.0
        %716 = vmatpush1.msra.mxu0 0.0
        %717 = vmatprep.subr.mxu0 0.0
        %718 = vmatpush1.msra.mxu0 0.0
        %719 = vmatprep.subr.mxu0 0.0
        %720 = vmatpush1.msra.mxu0 0.0
        %721 = vmatprep.subr.mxu0 0.0
        %722 = vmatpush1.msra.mxu0 0.0
        %723 = vmatprep.subr.mxu0 0.0
        %724 = vmatpush1.msra.mxu0 0.0
        %725 = vmatprep.subr.mxu0 0.0
        %726 = vmatpush1.msra.mxu0 0.0
        %727 = vmatprep.subr.mxu0 0.0
        %728 = vmatpush1.msra.mxu0 0.0
        %729 = vmatprep.subr.mxu0 0.0
        %730 = vmatpush1.msra.mxu0 0.0
        %731 = vmatprep.subr.mxu0 0.0
        %732 = vmatpush1.msra.mxu0 0.0
        %733 = vmatprep.subr.mxu0 0.0
        %734 = vmatpush1.msra.mxu0 0.0
        %735 = vmatprep.subr.mxu0 0.0
        %736 = vmatpush1.msra.mxu0 0.0
        %737 = vmatprep.subr.mxu0 0.0
        %738 = vmatpush1.msra.mxu0 0.0
        %739 = vmatprep.subr.mxu0 0.0
        %740 = vmatpush1.msra.mxu0 0.0
        %741 = vmatprep.subr.mxu0 0.0
        %742 = vmatpush1.msra.mxu0 0.0
        %743 = vmatprep.subr.mxu0 0.0
        %744 = vmatpush1.msra.mxu0 0.0
        %745 = vmatprep.mubr.f32.mxu0 0.0
        %746 = vmatmul.mubr.f32.gmra.mrb[0].mxu0 %v679
        %v747 = vpop.f32.mrb[0].mxu0
        %v748 = vadd.f32 0.0, %v747
        %v749 = vpop.f32.mrb[0].mxu0
        %750 = vdwg.mxu0
        %751 = vst.msk [vmem:[%s385] sm:$0xff] %vm413, %v675
        %752 = vst.msk [vmem:[%s385 + $0x8] sm:$0xff] %vm413, %v748
        %s753 = sand.u32 %s162, 1
        %s754 = scalar_lea.sflag [#allocation4], %s753
        %s755 = sand.u32 %s162, 1
        %s756 = smul.addr %s755, 16
        %s757 = scalar_lea.vmem [#allocation10], %s756
        %s758 = sand.u32 %s190, 1
        %s759 = scalar_lea.sflag [#allocation12], %s758
        %s760 = sand.u32 %s190, 1
        %s761 = smul.addr %s760, 16
        %s762 = scalar_lea.vmem [#allocation11], %s761
        // Predicated region
        $region53: #{tpu_custom_call.1} parent=35 // pred_check
          %p763 = pneg %p172
        $region54: #{tpu_custom_call.1} parent=35 // pred_check_branch
          %765 = sbr.rel (%p763) target = $region56
        $region55: #{tpu_custom_call.1} parent=35 // pred_region
          %s766 = smul.u32 2, %s36
          %s768 = ssub.s32 256, 256
          %769 = vsyncadd %s754, %s768
          %s770 = sadd.s32 %s37, %s766
          %s771 = smul.addr %s770, 128
          %s772 = scalar_lea.hbm %s4, %s771
          %s773 = sshll.u32 %s757, 4
          %s774 = int_to_ptr.vmem [resolvable:$true] %s773
          %779 = dma.vmem_to_hbm [thread:$0]  %s774, 256, %s772, %s754, 128, 128, 8
        $region56: #{tpu_custom_call.1} parent=35 // pred_fallthru
          _
        // Predicated region
        $region57: #{tpu_custom_call.1} parent=35 // pred_check
          %p780 = pneg %p200
        $region58: #{tpu_custom_call.1} parent=35 // pred_check_branch
          %782 = sbr.rel (%p780) target = $region60
        $region59: #{tpu_custom_call.1} parent=35 // pred_region
          %s783 = smul.u32 2, %s36
          %s785 = ssub.s32 256, 256
          %786 = vsyncadd %s759, %s785
          %s787 = sadd.s32 %s37, %s783
          %s788 = smul.addr %s787, 128
          %s789 = scalar_lea.hbm %s5, %s788
          %s790 = sshll.u32 %s762, 4
          %s791 = int_to_ptr.vmem [resolvable:$true] %s790
          %796 = dma.vmem_to_hbm [thread:$0]  %s791, 256, %s789, %s759, 128, 128, 8
        $region60: #{tpu_custom_call.1} parent=35 // pred_fallthru
          _
      $region36: #{tpu_custom_call.1} parent=5 // pred_fallthru
        _
      %p797 = scmp.le.s32.totalorder 2, %s27
      // Predicated region
      $region61: #{tpu_custom_call.1} parent=5 // pred_check
        %p798 = pneg %p797
      $region62: #{tpu_custom_call.1} parent=5 // pred_check_branch
        %800 = sbr.rel (%p798) target = $region64
      $region63: #{tpu_custom_call.1} parent=5 // pred_region
        %s801 = ssub.s32 %s27, 2
        // Predicated region
        $region65: #{tpu_custom_call.1} parent=63 // pred_check
          %p802 = pneg %p178
        $region66: #{tpu_custom_call.1} parent=63 // pred_check_branch
          %804 = sbr.rel (%p802) target = $region68
        $region67: #{tpu_custom_call.1} parent=63 // pred_region
          %s805 = sand.u32 %s163, 1
          %s806 = scalar_lea.sflag [#allocation4], %s805
          %s807 = sand.u32 %s163, 1
          %s808 = smul.addr %s807, 16
          %s809 = scalar_lea.vmem [#allocation10], %s808
          %810 = dma.done %s806, 256
        $region68: #{tpu_custom_call.1} parent=63 // pred_fallthru
          _
        // Predicated region
        $region69: #{tpu_custom_call.1} parent=63 // pred_check
          %p811 = pneg %p206
        $region70: #{tpu_custom_call.1} parent=63 // pred_check_branch
          %813 = sbr.rel (%p811) target = $region72
        $region71: #{tpu_custom_call.1} parent=63 // pred_region
          %s814 = sand.u32 %s191, 1
          %s815 = scalar_lea.sflag [#allocation12], %s814
          %s816 = sand.u32 %s191, 1
          %s817 = smul.addr %s816, 16
          %s818 = scalar_lea.vmem [#allocation11], %s817
          %819 = dma.done %s815, 256
        $region72: #{tpu_custom_call.1} parent=63 // pred_fallthru
          _
      $region64: #{tpu_custom_call.1} parent=5 // pred_fallthru
        _
    $region6: #{tpu_custom_call.1} parent=1 // loop_footer
      %s31 = sadd.s32 1, %s27
    $region7: #{tpu_custom_call.1} parent=1 // loop_footer_branch
      %26 = sbr.rel target = $region3
    $region8: #{tpu_custom_call.1} parent=1 // loop_exit
      _
    %820 = vsyncpa [#allocation3], 1
    %s821 = scalar_lea.sflag [#allocation3], 1
    %822 = vsyncpa %s821, 1
    %823 = vsyncpa [#allocation6], 1
    %s824 = scalar_lea.sflag [#allocation6], 1
    %825 = vsyncpa %s824, 1
    %826 = vsyncpa [#allocation9], 1
    %s827 = scalar_lea.sflag [#allocation9], 1
    %828 = vsyncpa %s827, 1
    %829 = vsyncpa [#allocation4], 1
    %s830 = scalar_lea.sflag [#allocation4], 1
    %831 = vsyncpa %s830, 1
    %832 = vsyncpa [#allocation12], 1
    %s833 = scalar_lea.sflag [#allocation12], 1
    %834 = vsyncpa %s833, 1

</llo_original>
